<compile_context>
chip_gen: v7x
topology: tpu7x:2x2x1
jax: 0.10.0
libtpu: 0.0.40
codegen_flags: <defaults>
</compile_context>

<pallas_src>
import math
import functools

import jax
import jax.numpy as jnp
from jax.experimental import pallas as pl
from jax.experimental.pallas import tpu as pltpu


def _arcface_kernel(hit_smem, lab_ref, emb_ref, ker_ref, out_ref, inv_ref,
                    *, s, cos_m, sin_m, mm, threshold,
                    tile_c, tile_b, num_c_tiles, emb_resident, matmul_dtype):
    """One grid step: a (tile_b, tile_c) output slab."""
    j = pl.program_id(0)          # class-tile index (outer)
    b = pl.program_id(1)          # batch-tile index (inner)

    # --- column-wise inverse L2 norm: compute once per class tile, cache ---
    # Valid because batch is the inner ("arbitrary") grid axis, so b == 0 runs
    # before any b > 0 for the same class tile j on the same core.
    @pl.when(b == 0)
    def _():
        kf = ker_ref[...].astype(jnp.float32)               # identity for f32
        # Note: an all-zero weight column gives inf here (and NaN cos), which
        # matches the reference's divide-by-zero behaviour.
        inv_ref[...] = jax.lax.rsqrt(
            jnp.sum(kf * kf, axis=0, keepdims=True))        # (1, TC)

    # --- gather this batch tile's rows (resident or pre-tiled) ---
    if emb_resident:
        row0 = pl.multiple_of(b * tile_b, tile_b)
        emb = emb_ref[pl.ds(row0, tile_b), :]                # (TB, E)
        lab = lab_ref[pl.ds(row0, tile_b), :]                # (TB, 1)
    else:
        emb = emb_ref[...]
        lab = lab_ref[...]

    # --- cos(theta): matmul in native (or requested) dtype, f32 accumulate ---
    k = ker_ref[...]                                         # (E, TC)
    if matmul_dtype is not None:
        emb = emb.astype(matmul_dtype)
        k = k.astype(matmul_dtype)
    dot = jnp.dot(emb, k, preferred_element_type=jnp.float32)  # (TB, TC)
    cos = jnp.clip(dot * inv_ref[...], -1.0, 1.0)

    # --- does any label of this batch tile land in this class tile? ---
    # One SMEM load (precomputed hit table) instead of a serial scalar scan.
    has_label = hit_smem[b * num_c_tiles + j] > 0

    @pl.when(has_label)
    def _():
        # ArcFace margin (only when a label column lives in this tile).
        sin = jnp.sqrt(jnp.maximum(1.0 - cos * cos, 0.0))
        cos_theta_m = cos * cos_m - sin * sin_m
        cos_theta_m = jnp.where((cos - threshold) <= 0.0, cos - mm, cos_theta_m)

        col = j * tile_c + jax.lax.broadcasted_iota(jnp.int32, cos.shape, 1)
        is_label = col == lab                                # (TB,1) -> (TB,TC)
        out_ref[...] = (jnp.where(is_label, cos_theta_m, cos) * s
                        ).astype(out_ref.dtype)

    @pl.when(jnp.logical_not(has_label))
    def _():
        out_ref[...] = (cos * s).astype(out_ref.dtype)


def _pick_vmem_limit():
    """Per-generation VMEM budget: generous on 128 MiB v5e/v6e, tight on 64 MiB v7x."""
    try:
        cap = pltpu.get_tpu_info().vmem_capacity_bytes
    except Exception:
        cap = 64 * 1024 * 1024
    return int(min(max(cap - 24 * 1024 * 1024, 32 * 1024 * 1024),
                   100 * 1024 * 1024))


def arcface_forward(embeddings, kernel, label, *, s=64.0, m=0.5,
                    tile_c=1024, tile_b=256, matmul_dtype=None):
    B, E = embeddings.shape
    E2, C = kernel.shape
    assert E == E2
    tile_c = min(tile_c, C)
    tile_b = min(tile_b, B)
    assert C % tile_c == 0 and B % tile_b == 0

    cos_m = math.cos(m)
    sin_m = math.sin(m)
    mm = sin_m * m
    threshold = math.cos(math.pi - m)

    num_c_tiles = C // tile_c
    num_b_tiles = B // tile_b

    label_flat = label.astype(jnp.int32)
    label2d = label_flat.reshape(B, 1)                       # VMEM (vector mask)

    # Precomputed hit table: hit[b_tile * num_c_tiles + c_tile] = 1 iff some
    # row of batch tile b_tile has its label inside class tile c_tile.
    b_idx = (jnp.arange(B, dtype=jnp.int32) // tile_b)
    c_idx = label_flat // tile_c
    hit_table = jnp.zeros((num_b_tiles * num_c_tiles,), jnp.int32
                          ).at[b_idx * num_c_tiles + c_idx].set(1)

    # Keep embeddings (and labels) fully VMEM-resident when small enough:
    # avoids re-streaming (tile_b, E) for every class tile.
    emb_resident = (B * E * embeddings.dtype.itemsize) <= 8 * 1024 * 1024
    if emb_resident:
        lab_spec = pl.BlockSpec((B, 1), lambda j, b, hit: (0, 0))
        emb_spec = pl.BlockSpec((B, E), lambda j, b, hit: (0, 0))
    else:
        lab_spec = pl.BlockSpec((tile_b, 1), lambda j, b, hit: (b, 0))
        emb_spec = pl.BlockSpec((tile_b, E), lambda j, b, hit: (b, 0))

    # Weight slab's block index depends only on j (outer axis), so it is
    # DMA'd once per class tile and reused across all inner batch tiles.
    # TODO(synk): if xprof shows exposed weight DMA when num_b_tiles == 1,
    #             add pipeline_mode=pl.Buffered(3) to this BlockSpec.
    ker_spec = pl.BlockSpec((E, tile_c), lambda j, b, hit: (0, j))

    kern = functools.partial(
        _arcface_kernel, s=s, cos_m=cos_m, sin_m=sin_m,
        mm=mm, threshold=threshold, tile_c=tile_c, tile_b=tile_b,
        num_c_tiles=num_c_tiles, emb_resident=emb_resident,
        matmul_dtype=matmul_dtype)

    grid = (num_c_tiles, num_b_tiles)   # class tiles outer, batch tiles inner

    return pl.pallas_call(
        kern,
        out_shape=jax.ShapeDtypeStruct((B, C), jnp.float32),
        grid_spec=pltpu.PrefetchScalarGridSpec(
            num_scalar_prefetch=1,
            grid=grid,
            in_specs=[lab_spec, emb_spec, ker_spec],
            out_specs=pl.BlockSpec((tile_b, tile_c), lambda j, b, hit: (b, j)),
            scratch_shapes=[pltpu.VMEM((1, tile_c), jnp.float32)],
        ),
        compiler_params=pltpu.CompilerParams(
            # Class axis "parallel" (megacore shards the weight stream);
            # batch axis "arbitrary" so the cached inv_norm ordering holds.
            dimension_semantics=("parallel", "arbitrary"),
            vmem_limit_bytes=_pick_vmem_limit()),
    )(hit_table, label2d, embeddings, kernel)


def _reference(embeddings, kernel, label, *, s=64.0, m=0.5):
    """Pure-JAX reference mirroring the PyTorch forward."""
    cos_m, sin_m = math.cos(m), math.sin(m)
    mm = sin_m * m
    threshold = math.cos(math.pi - m)
    kn = kernel / jnp.linalg.norm(kernel, axis=0, keepdims=True)
    cos = jnp.clip(embeddings @ kn, -1.0, 1.0)
    sin = jnp.sqrt(1.0 - cos * cos)
    cos_t_m = cos * cos_m - sin * sin_m
    cos_t_m = jnp.where((cos - threshold) <= 0.0, cos - mm, cos_t_m)
    B = embeddings.shape[0]
    out = cos.at[jnp.arange(B), label].set(cos_t_m[jnp.arange(B), label])
    return out * s


if __name__ == "__main__":
    # Small, kernel-friendly shapes consistent with the module's forward.
    B, E, C = 8, 128, 4096          # batch, embedding_size, classnum
    key = jax.random.PRNGKey(0)
    k_emb, k_ker, k_lab = jax.random.split(key, 3)

    # Deterministic parameter init, shape (E, C), uniform(-1, 1) like __init__.
    # TODO(synk): the in-place renorm_(2,1,1e-5).mul_(1e5) init trick only
    #             affects initialization scale, not forward semantics.
    kernel_w = jax.random.uniform(k_ker, (E, C), jnp.float32, -1.0, 1.0)

    # Embeddings (L2-normalized, as ArcFace expects) and labels.
    emb = jax.random.normal(k_emb, (B, E), jnp.float32)
    emb = emb / jnp.linalg.norm(emb, axis=1, keepdims=True)
    label = jax.random.randint(k_lab, (B,), 0, C, dtype=jnp.int32)

    out = arcface_forward(emb, kernel_w, label, s=64.0, m=0.5)
    out = jax.block_until_ready(out)

    ref = _reference(emb, kernel_w, label, s=64.0, m=0.5)
    assert out.shape == (B, C)
    assert jnp.allclose(out, ref, atol=1e-3, rtol=1e-3)

    print("KERNEL_OK")
</pallas_src>

<mosaic_0001>
module attributes {stable_mosaic.version = 11 : i64} {
  func.func @_arcface_kernel(%arg0: i32, %arg1: i32, %arg2: memref<4xi32, #tpu.memory_space<smem>>, %arg3: memref<8x1xi32, #tpu.memory_space<vmem>>, %arg4: memref<8x128xf32, #tpu.memory_space<vmem>>, %arg5: memref<128x1024xf32, #tpu.memory_space<vmem>>, %arg6: memref<8x1024xf32, #tpu.memory_space<vmem>>, %arg7: memref<1x1024xf32, #tpu.memory_space<vmem>>) attributes {dimension_semantics = [#tpu.dimension_semantics<parallel>, #tpu.dimension_semantics<arbitrary>], iteration_bounds = array<i64: 4, 1>, scalar_prefetch = 1 : i64, scratch_operands = 1 : i64, tpu.core_type = #tpu.core_type<tc>, window_params = [{pipeline_mode = #tpu.pipeline_mode<synchronous>, transform_indices = @transform_0, window_bounds = array<i64: 8, 1>}, {pipeline_mode = #tpu.pipeline_mode<synchronous>, transform_indices = @transform_1, window_bounds = array<i64: 8, 128>}, {transform_indices = @transform_2, window_bounds = array<i64: 128, 1024>}, {transform_indices = @transform_3, window_bounds = array<i64: 8, 1024>}]} {
    %c0_i32 = arith.constant 0 : i32
    %0 = arith.cmpi eq, %arg1, %c0_i32 : i32
    %1 = arith.extui %0 : i1 to i32
    %c0_i32_0 = arith.constant 0 : i32
    %2 = arith.cmpi ne, %1, %c0_i32_0 : i32
    scf.if %2 {
      %c0_11 = arith.constant 0 : index
      %c0_12 = arith.constant 0 : index
      %28 = vector.load %arg5[%c0_11, %c0_12] : memref<128x1024xf32, #tpu.memory_space<vmem>>, vector<128x1024xf32>
      %29 = arith.mulf %28, %28 : vector<128x1024xf32>
      %cst_13 = arith.constant dense<0.000000e+00> : vector<1024xf32>
      %30 = vector.multi_reduction <add>, %29, %cst_13 [0] : vector<128x1024xf32> to vector<1024xf32>
      %31 = vector.shape_cast %30 : vector<1024xf32> to vector<1x1024xf32>
      %32 = math.rsqrt %31 : vector<1x1024xf32>
      %c0_14 = arith.constant 0 : index
      %c0_15 = arith.constant 0 : index
      %33 = vector.load %arg7[%c0_14, %c0_15] : memref<1x1024xf32, #tpu.memory_space<vmem>>, vector<1x1024xf32>
      tpu.vector_store %arg7[%c0_14, %c0_15], %32 {strides = array<i32>} : memref<1x1024xf32, #tpu.memory_space<vmem>>, vector<1x1024xf32>,
    } else {
    }
    %c8_i32 = arith.constant 8 : i32
    %3 = arith.muli %arg1, %c8_i32 : i32
    %4 = tpu.assume_multiple %3, 8 : i32
    %5 = arith.index_cast %4 : i32 to index
    %c0 = arith.constant 0 : index
    %6 = vector.load %arg4[%5, %c0] : memref<8x128xf32, #tpu.memory_space<vmem>>, vector<8x128xf32>
    %7 = arith.index_cast %4 : i32 to index
    %c0_1 = arith.constant 0 : index
    %8 = vector.load %arg3[%7, %c0_1] : memref<8x1xi32, #tpu.memory_space<vmem>>, vector<8x1xi32>
    %c0_2 = arith.constant 0 : index
    %c0_3 = arith.constant 0 : index
    %9 = vector.load %arg5[%c0_2, %c0_3] : memref<128x1024xf32, #tpu.memory_space<vmem>>, vector<128x1024xf32>
    %cst = arith.constant dense<0.000000e+00> : vector<8x1024xf32>
    %10 = tpu.matmul %6, %9, %cst {dimension_numbers = #tpu.dot_dimension_numbers<[1], [0], [0], [1], [0, 0, 1, 1], [], []>} : vector<8x128xf32>, vector<128x1024xf32>, vector<8x1024xf32> -> vector<8x1024xf32>
    %c0_4 = arith.constant 0 : index
    %c0_5 = arith.constant 0 : index
    %11 = vector.load %arg7[%c0_4, %c0_5] : memref<1x1024xf32, #tpu.memory_space<vmem>>, vector<1x1024xf32>
    %12 = vector.broadcast %11 : vector<1x1024xf32> to vector<8x1024xf32>
    %13 = arith.mulf %10, %12 : vector<8x1024xf32>
    %cst_6 = arith.constant -1.000000e+00 : f32
    %cst_7 = arith.constant 1.000000e+00 : f32
    %14 = vector.broadcast %cst_6 : f32 to vector<8x1024xf32>
    %15 = arith.maximumf %14, %13 : vector<8x1024xf32>
    %16 = vector.broadcast %cst_7 : f32 to vector<8x1024xf32>
    %17 = arith.minimumf %16, %15 : vector<8x1024xf32>
    %c4_i32 = arith.constant 4 : i32
    %18 = arith.muli %arg1, %c4_i32 : i32
    %19 = arith.addi %18, %arg0 : i32
    %20 = arith.index_cast %19 : i32 to index
    %21 = memref.load %arg2[%20] : memref<4xi32, #tpu.memory_space<smem>>
    %c0_i32_8 = arith.constant 0 : i32
    %22 = arith.cmpi sgt, %21, %c0_i32_8 : i32
    %23 = arith.extui %22 : i1 to i32
    %c0_i32_9 = arith.constant 0 : i32
    %24 = arith.cmpi ne, %23, %c0_i32_9 : i32
    scf.if %24 {
      %28 = arith.mulf %17, %17 : vector<8x1024xf32>
      %cst_11 = arith.constant 1.000000e+00 : f32
      %29 = vector.broadcast %cst_11 : f32 to vector<8x1024xf32>
      %30 = arith.subf %29, %28 : vector<8x1024xf32>
      %cst_12 = arith.constant 0.000000e+00 : f32
      %31 = vector.broadcast %cst_12 : f32 to vector<8x1024xf32>
      %32 = arith.maximumf %30, %31 : vector<8x1024xf32>
      %33 = math.sqrt %32 : vector<8x1024xf32>
      %cst_13 = arith.constant 0.87758255 : f32
      %34 = vector.broadcast %cst_13 : f32 to vector<8x1024xf32>
      %35 = arith.mulf %17, %34 : vector<8x1024xf32>
      %cst_14 = arith.constant 0.47942555 : f32
      %36 = vector.broadcast %cst_14 : f32 to vector<8x1024xf32>
      %37 = arith.mulf %33, %36 : vector<8x1024xf32>
      %38 = arith.subf %35, %37 : vector<8x1024xf32>
      %cst_15 = arith.constant -0.87758255 : f32
      %39 = vector.broadcast %cst_15 : f32 to vector<8x1024xf32>
      %40 = arith.subf %17, %39 : vector<8x1024xf32>
      %cst_16 = arith.constant 0.000000e+00 : f32
      %41 = vector.broadcast %cst_16 : f32 to vector<8x1024xf32>
      %42 = arith.cmpf ole, %40, %41 : vector<8x1024xf32>
      %cst_17 = arith.constant 0.239712775 : f32
      %43 = vector.broadcast %cst_17 : f32 to vector<8x1024xf32>
      %44 = arith.subf %17, %43 : vector<8x1024xf32>
      %45 = arith.select %42, %44, %38 : vector<8x1024xi1>, vector<8x1024xf32>
      %c1024_i32 = arith.constant 1024 : i32
      %46 = arith.muli %arg0, %c1024_i32 : i32
      %47 = tpu.iota {dimensions = array<i32: 1>} : vector<8x1024xi32>
      %48 = vector.broadcast %46 : i32 to vector<8x1024xi32>
      %49 = arith.addi %48, %47 : vector<8x1024xi32>
      %50 = vector.broadcast %8 : vector<8x1xi32> to vector<8x1024xi32>
      %51 = arith.cmpi eq, %49, %50 : vector<8x1024xi32>
      %52 = arith.select %51, %45, %17 : vector<8x1024xi1>, vector<8x1024xf32>
      %cst_18 = arith.constant 6.400000e+01 : f32
      %53 = vector.broadcast %cst_18 : f32 to vector<8x1024xf32>
      %54 = arith.mulf %52, %53 : vector<8x1024xf32>
      %c0_19 = arith.constant 0 : index
      %c0_20 = arith.constant 0 : index
      %55 = vector.load %arg6[%c0_19, %c0_20] : memref<8x1024xf32, #tpu.memory_space<vmem>>, vector<8x1024xf32>
      tpu.vector_store %arg6[%c0_19, %c0_20], %54 {strides = array<i32>} : memref<8x1024xf32, #tpu.memory_space<vmem>>, vector<8x1024xf32>,
    } else {
    }
    %true = arith.constant true
    %25 = arith.xori %22, %true : i1
    %26 = arith.extui %25 : i1 to i32
    %c0_i32_10 = arith.constant 0 : i32
    %27 = arith.cmpi ne, %26, %c0_i32_10 : i32
    scf.if %27 {
      %cst_11 = arith.constant 6.400000e+01 : f32
      %28 = vector.broadcast %cst_11 : f32 to vector<8x1024xf32>
      %29 = arith.mulf %17, %28 : vector<8x1024xf32>
      %c0_12 = arith.constant 0 : index
      %c0_13 = arith.constant 0 : index
      %30 = vector.load %arg6[%c0_12, %c0_13] : memref<8x1024xf32, #tpu.memory_space<vmem>>, vector<8x1024xf32>
      tpu.vector_store %arg6[%c0_12, %c0_13], %29 {strides = array<i32>} : memref<8x1024xf32, #tpu.memory_space<vmem>>, vector<8x1024xf32>,
    } else {
    }
    return
  }
  func.func @transform_0(%arg0: i32, %arg1: i32, %arg2: memref<4xi32, #tpu.memory_space<smem>>) -> (i32, i32) {
    %c0_i32 = arith.constant 0 : i32
    %c0_i32_0 = arith.constant 0 : i32
    %c0_i32_1 = arith.constant 0 : i32
    return %c0_i32, %c0_i32_0 : i32, i32
  }
  func.func @transform_1(%arg0: i32, %arg1: i32, %arg2: memref<4xi32, #tpu.memory_space<smem>>) -> (i32, i32) {
    %c0_i32 = arith.constant 0 : i32
    %c0_i32_0 = arith.constant 0 : i32
    %c0_i32_1 = arith.constant 0 : i32
    return %c0_i32, %c0_i32_0 : i32, i32
  }
  func.func @transform_2(%arg0: i32, %arg1: i32, %arg2: memref<4xi32, #tpu.memory_space<smem>>) -> (i32, i32) {
    %c0_i32 = arith.constant 0 : i32
    %c0_i32_0 = arith.constant 0 : i32
    return %c0_i32, %arg0 : i32, i32
  }
  func.func @transform_3(%arg0: i32, %arg1: i32, %arg2: memref<4xi32, #tpu.memory_space<smem>>) -> (i32, i32) {
    %c0_i32 = arith.constant 0 : i32
    return %arg1, %arg0 : i32, i32
  }
}

</mosaic_0001>

<llo_original>
// kernel: tpu_custom_call.1
$region0: #{tpu_custom_call.1}
  #allocation0 [shape = 'u32[]', space=smem, size = 0x4, offset = 0x4, fixed_abs, tag = 'smem constant byte address 0x4 - core index']
  #allocation1 [shape = 'u32[144,128]{1,0:T(1,128)}', space=vmem, size = 0x12000, scoped, tag = 'internal scratch']
  #allocation2 [shape = 'f32[1,1024]{1,0:T(1,128)}', space=vmem, size = 0x1000, scoped, tag = 'scratch operand']
  #allocation3 [shape = 's32[1]{0}', space=sflag, size = 0x4, scoped, tag = 'scoped memory for tpu_custom_call.1']
  #allocation4 [shape = 'u8[512]{0}', space=smem, size = 0x200, scoped, tag = 'prefetched SMEM operand 0']
  %s0 = inlined_call_operand.hbm [shape: s32[4], index: 0, kind: input, shape index: {}]
  %s1 = inlined_call_operand.vmem [shape: s32[8,1], index: 1, kind: input, shape index: {}]
  %s2 = inlined_call_operand.hbm [shape: f32[8,128], index: 2, kind: input, shape index: {}]
  %s3 = inlined_call_operand.hbm [shape: f32[128,4096], index: 3, kind: input, shape index: {}]
  %s4 = inlined_call_operand.hbm [shape: f32[8,4096], index: 4, kind: output, shape index: {}]
  %s5 = sld [smem:[#allocation0]]
  $region65: #{tpu_custom_call.1} parent=0
    _
  %s7 = ssub.s32 1, %s5
  %s8 = scalar_select 0, %s7, %s5
  %10 = dma.hbm_to_smem %s0, 16, [#allocation4], [#allocation3]
  %11 = dma.done [#allocation3], 16
  %12 = sfence
  $region1: #{tpu_custom_call.1} parent=0
    #allocation5 [shape = 'u8[4096]{0}', space=vmem, size = 0x1000, scoped, tag = 'input window, operand 2, single buffered']
    #allocation6 [shape = 's32[2]{0}', space=sflag, size = 0x8, scoped, tag = 'scoped memory for tpu_custom_call.1']
    #allocation7 [shape = 's32[2]{0}', space=sflag, size = 0x8, scoped, tag = 'scoped memory for tpu_custom_call.1']
    #allocation8 [shape = 'u8[1048576]{0}', space=vmem, size = 0x100000, scoped, tag = 'input window, operand 3']
    #allocation9 [shape = 's32[2]{0}', space=sflag, size = 0x8, scoped, tag = 'scoped memory for tpu_custom_call.1']
    #allocation10 [shape = 'u8[65536]{0}', space=vmem, size = 0x10000, scoped, tag = 'output window, operand 0']
    %13 = vsyncpa [#allocation6], 0
    %14 = vsyncpa [#allocation9], 0
    %s15 = scalar_lea.sflag [#allocation9], 1
    %16 = vsyncpa %s15, 0
    %17 = vsyncpa [#allocation7], 0
    %s18 = scalar_lea.sflag [#allocation7], 1
    %19 = vsyncpa %s18, 0
    loop: start=0, step=1, limit=6
    $region2: #{tpu_custom_call.1} parent=1 // loop_pre_header
      _
    $region3: #{tpu_custom_call.1} parent=1 // loop_header
      %s21 = sphi 0, %s25
      %p22 = scmp.ge.s32.totalorder %s21, 6
      %s28 = sphi 0, %s40
      %s29 = sphi 0, %s36
      %s30 = sphi 0, %s28
      %s31 = sphi 0, %s29
      %s32 = sphi 0, %s30
      %s33 = sphi 0, %s31
      %s41 = sphi 0, %s41
      %s43 = sphi 0, %s41
      %s44 = sphi 0, %s43
      %s58 = sphi 0, %s44
      %s62 = sphi 0, %s62
      %s64 = sphi 0, %s62
      %s65 = sphi 0, %s64
      %s79 = sphi 0, %s65
      %s85 = sphi 0, %s87
      %s88 = sphi 0, %s85
      %s89 = sphi 0, %s88
      %s105 = sphi 0, %s89
      %s113 = sphi 0, %s115
      %s116 = sphi 0, %s113
      %s117 = sphi 0, %s116
      %s133 = sphi 0, %s117
    $region4: #{tpu_custom_call.1} parent=1 // loop_header_branch
      %24 = sbr.rel (%p22) target = $region8
    $region5: #{tpu_custom_call.1} parent=1 // loop_body
      %s26 = ssub.s32 %s21, 1
      %s27 = ssub.s32 %s21, 2
      %s34 = sadd.s32 1, %s29
      %p35 = scmp.ge.s32.totalorder %s34, 1
      %s36 = scalar_select %p35, 0, %s34
      %s37 = sadd.s32 1, %s28
      %s38 = scalar_select %p35, %s37, %s28
      %p39 = scmp.ge.s32.totalorder %s38, 4
      %s40 = scalar_select %p39, 0, %s38
      %s42 = sadd.s32 %s41, 1
      %p45 = scmp.eq.s32.totalorder %s21, 3
      %p46 = scmp.ne.s32.totalorder %s41, %s43
      %p47 = scmp.eq.s32.totalorder %s21, 0
      %p48 = por %p46, %p47
      %p49 = scmp.ne.s32.totalorder %s41, %s43
      %p50 = scmp.eq.s32.totalorder %s26, 3
      %p51 = por %p49, %p50
      %p52 = scmp.ne.s32.totalorder %s43, %s44
      %p53 = scmp.eq.s32.totalorder %s26, 0
      %p54 = por %p52, %p53
      %p55 = scmp.ne.s32.totalorder %s43, %s44
      %p56 = scmp.eq.s32.totalorder %s27, 3
      %p57 = por %p55, %p56
      %p59 = scmp.ne.s32.totalorder %s44, %s58
      %p60 = scmp.eq.s32.totalorder %s27, 0
      %p61 = por %p59, %p60
      %s63 = sadd.s32 %s62, 1
      %p66 = scmp.eq.s32.totalorder %s21, 3
      %p67 = scmp.ne.s32.totalorder %s62, %s64
      %p68 = scmp.eq.s32.totalorder %s21, 0
      %p69 = por %p67, %p68
      %p70 = scmp.ne.s32.totalorder %s62, %s64
      %p71 = scmp.eq.s32.totalorder %s26, 3
      %p72 = por %p70, %p71
      %p73 = scmp.ne.s32.totalorder %s64, %s65
      %p74 = scmp.eq.s32.totalorder %s26, 0
      %p75 = por %p73, %p74
      %p76 = scmp.ne.s32.totalorder %s64, %s65
      %p77 = scmp.eq.s32.totalorder %s27, 3
      %p78 = por %p76, %p77
      %p80 = scmp.ne.s32.totalorder %s65, %s79
      %p81 = scmp.eq.s32.totalorder %s27, 0
      %p82 = por %p80, %p81
      %s83 = ssub.s32 %s28, %s40
      %p84 = scmp.eq.s32.totalorder %s83, 0
      %s86 = sadd.s32 %s85, 1
      %s87 = scalar_select %p84, %s85, %s86
      %p90 = pneg %p84
      %p91 = scmp.eq.s32.totalorder %s21, 3
      %p92 = por %p90, %p91
      %p93 = scmp.ne.s32.totalorder %s85, %s88
      %p94 = scmp.eq.s32.totalorder %s21, 0
      %p95 = por %p93, %p94
      %p96 = scmp.ne.s32.totalorder %s85, %s88
      %p97 = scmp.eq.s32.totalorder %s26, 3
      %p98 = por %p96, %p97
      %p99 = scmp.ne.s32.totalorder %s88, %s89
      %p100 = scmp.eq.s32.totalorder %s26, 0
      %p101 = por %p99, %p100
      %p102 = scmp.ne.s32.totalorder %s88, %s89
      %p103 = scmp.eq.s32.totalorder %s27, 3
      %p104 = por %p102, %p103
      %p106 = scmp.ne.s32.totalorder %s89, %s105
      %p107 = scmp.eq.s32.totalorder %s27, 0
      %p108 = por %p106, %p107
      %s109 = ssub.s32 %s29, %s36
      %s110 = ssub.s32 %s28, %s40
      %s111 = sor.u32 %s109, %s110
      %p112 = scmp.eq.s32.totalorder %s111, 0
      %s114 = sadd.s32 %s113, 1
      %s115 = scalar_select %p112, %s113, %s114
      %p118 = pneg %p112
      %p119 = scmp.eq.s32.totalorder %s21, 3
      %p120 = por %p118, %p119
      %p121 = scmp.ne.s32.totalorder %s113, %s116
      %p122 = scmp.eq.s32.totalorder %s21, 0
      %p123 = por %p121, %p122
      %p124 = scmp.ne.s32.totalorder %s113, %s116
      %p125 = scmp.eq.s32.totalorder %s26, 3
      %p126 = por %p124, %p125
      %p127 = scmp.ne.s32.totalorder %s116, %s117
      %p128 = scmp.eq.s32.totalorder %s26, 0
      %p129 = por %p127, %p128
      %p130 = scmp.ne.s32.totalorder %s116, %s117
      %p131 = scmp.eq.s32.totalorder %s27, 3
      %p132 = por %p130, %p131
      %p134 = scmp.ne.s32.totalorder %s117, %s133
      %p135 = scmp.eq.s32.totalorder %s27, 0
      %p136 = por %p134, %p135
      %p137 = scmp.le.s32.totalorder 1, %s21
      %p138 = scmp.lt.s32.totalorder %s21, 5
      %p139 = pnand %p137, %p138
      %p140 = pneg %p139
      // Predicated region
      $region9: #{tpu_custom_call.1} parent=5 // pred_check
        _
      $region10: #{tpu_custom_call.1} parent=5 // pred_check_branch
        %142 = sbr.rel (%p139) target = $region12
      $region11: #{tpu_custom_call.1} parent=5 // pred_region
        %s143 = ssub.s32 %s21, 1
        // Predicated region
        $region13: #{tpu_custom_call.1} parent=11 // pred_check
          %p144 = pneg %p54
        $region14: #{tpu_custom_call.1} parent=11 // pred_check_branch
          %146 = sbr.rel (%p144) target = $region16
        $region15: #{tpu_custom_call.1} parent=11 // pred_region
          _
        $region16: #{tpu_custom_call.1} parent=11 // pred_fallthru
          _
        // Predicated region
        $region17: #{tpu_custom_call.1} parent=11 // pred_check
          %p147 = pneg %p75
        $region18: #{tpu_custom_call.1} parent=11 // pred_check_branch
          %149 = sbr.rel (%p147) target = $region20
        $region19: #{tpu_custom_call.1} parent=11 // pred_region
          %s151 = ssub.s32 128, 128
          %152 = vsyncadd [#allocation6], %s151
          %s154 = sshll.u32 [#allocation5], 4
          %s155 = int_to_ptr.vmem [resolvable:$true] %s154
          %157 = dma.hbm_to_vmem [thread:$0]  %s2, 128, %s155, [#allocation6]
        $region20: #{tpu_custom_call.1} parent=11 // pred_fallthru
          _
      $region12: #{tpu_custom_call.1} parent=5 // pred_fallthru
        _
      %p158 = scmp.lt.s32.totalorder %s21, 4
      // Predicated region
      $region21: #{tpu_custom_call.1} parent=5 // pred_check
        %p159 = pneg %p158
      $region22: #{tpu_custom_call.1} parent=5 // pred_check_branch
        %161 = sbr.rel (%p159) target = $region24
      $region23: #{tpu_custom_call.1} parent=5 // pred_region
        // Predicated region
        $region25: #{tpu_custom_call.1} parent=23 // pred_check
          %p162 = pneg %p95
        $region26: #{tpu_custom_call.1} parent=23 // pred_check_branch
          %164 = sbr.rel (%p162) target = $region28
        $region27: #{tpu_custom_call.1} parent=23 // pred_region
          %s165 = sand.u32 %s85, 1
          %s166 = scalar_lea.sflag [#allocation9], %s165
          %s167 = sand.u32 %s85, 1
          %s168 = smul.addr %s167, 1024
          %s169 = scalar_lea.vmem [#allocation8], %s168
          %s170 = smul.u32 8, %s28
          %s172 = ssub.s32 16384, 16384
          %173 = vsyncadd %s166, %s172
          %s174 = smul.addr %s170, 128
          %s175 = scalar_lea.hbm %s3, %s174
          %s176 = sshll.u32 %s169, 4
          %s177 = int_to_ptr.vmem [resolvable:$true] %s176
          %182 = dma.hbm_to_vmem [thread:$0]  %s175, 16384, %s177, %s166, 4096, 1024, 64
        $region28: #{tpu_custom_call.1} parent=23 // pred_fallthru
          _
      $region24: #{tpu_custom_call.1} parent=5 // pred_fallthru
        _
      %p183 = scmp.le.s32.totalorder 1, %s21
      %p184 = scmp.lt.s32.totalorder %s21, 5
      %p185 = pnand %p183, %p184
      %p186 = pneg %p185
      // Predicated region
      $region29: #{tpu_custom_call.1} parent=5 // pred_check
        _
      $region30: #{tpu_custom_call.1} parent=5 // pred_check_branch
        %188 = sbr.rel (%p185) target = $region32
      $region31: #{tpu_custom_call.1} parent=5 // pred_region
        %s189 = ssub.s32 %s21, 1
        // Predicated region
        $region33: #{tpu_custom_call.1} parent=31 // pred_check
          %p190 = pneg %p75
        $region34: #{tpu_custom_call.1} parent=31 // pred_check_branch
          %192 = sbr.rel (%p190) target = $region36
        $region35: #{tpu_custom_call.1} parent=31 // pred_region
          %193 = dma.done [#allocation6], 128
        $region36: #{tpu_custom_call.1} parent=31 // pred_fallthru
          _
        %s194 = sand.u32 %s88, 1
        %s195 = scalar_lea.sflag [#allocation9], %s194
        %s196 = sand.u32 %s88, 1
        %s197 = smul.addr %s196, 1024
        %s198 = scalar_lea.vmem [#allocation8], %s197
        // Predicated region
        $region37: #{tpu_custom_call.1} parent=31 // pred_check
          %p199 = pneg %p101
        $region38: #{tpu_custom_call.1} parent=31 // pred_check_branch
          %201 = sbr.rel (%p199) target = $region40
        $region39: #{tpu_custom_call.1} parent=31 // pred_region
          %202 = dma.done %s195, 16384
        $region40: #{tpu_custom_call.1} parent=31 // pred_fallthru
          _
        %p203 = pneg %p54
        %p204 = pneg %p51
        %p205 = pneg %p75
        %p206 = pneg %p72
        %s207 = sand.u32 %s88, 1
        %s208 = scalar_lea.sflag [#allocation9], %s207
        %s209 = sand.u32 %s88, 1
        %s210 = smul.addr %s209, 1024
        %s211 = scalar_lea.vmem [#allocation8], %s210
        %p212 = pneg %p101
        %p213 = pneg %p98
        %p214 = pneg %p129
        %p215 = pneg %p126
        %s216 = sand.u32 %s116, 1
        %s217 = scalar_lea.sflag [#allocation7], %s216
        %s218 = sand.u32 %s116, 1
        %s219 = smul.addr %s218, 64
        %s220 = scalar_lea.vmem [#allocation10], %s219
        %s221 = smul.u32 8, %s30
        %s222 = smul.u32 8, %s30
        %p223 = scmp.eq.s32.totalorder %s31, 0
        // Predicated region
        $region41: #{tpu_custom_call.1} parent=31 // pred_check
          %p224 = pneg %p223
        $region42: #{tpu_custom_call.1} parent=31 // pred_check_branch
          %226 = sbr.rel (%p224) target = $region44
        $region43: #{tpu_custom_call.1} parent=31 // pred_region
          %v227 = vld [vmem:[%s198] sm:$0xff]
          %v228 = vld [vmem:[%s198 + $0x8] sm:$0xff]
          %v229 = vld [vmem:[%s198 + $0x10] sm:$0xff]
          %v230 = vld [vmem:[%s198 + $0x18] sm:$0xff]
          %v231 = vld [vmem:[%s198 + $0x20] sm:$0xff]
          %v232 = vld [vmem:[%s198 + $0x28] sm:$0xff]
          %v233 = vld [vmem:[%s198 + $0x30] sm:$0xff]
          %v234 = vld [vmem:[%s198 + $0x38] sm:$0xff]
          %v235 = vld [vmem:[%s198 + $0x40] sm:$0xff]
          %v236 = vld [vmem:[%s198 + $0x48] sm:$0xff]
          %v237 = vld [vmem:[%s198 + $0x50] sm:$0xff]
          %v238 = vld [vmem:[%s198 + $0x58] sm:$0xff]
          %v239 = vld [vmem:[%s198 + $0x60] sm:$0xff]
          %v240 = vld [vmem:[%s198 + $0x68] sm:$0xff]
          %v241 = vld [vmem:[%s198 + $0x70] sm:$0xff]
          %v242 = vld [vmem:[%s198 + $0x78] sm:$0xff]
          %v243 = vld [vmem:[%s198 + $0x80] sm:$0xff]
          %v244 = vld [vmem:[%s198 + $0x88] sm:$0xff]
          %v245 = vld [vmem:[%s198 + $0x90] sm:$0xff]
          %v246 = vld [vmem:[%s198 + $0x98] sm:$0xff]
          %v247 = vld [vmem:[%s198 + $0xa0] sm:$0xff]
          %v248 = vld [vmem:[%s198 + $0xa8] sm:$0xff]
          %v249 = vld [vmem:[%s198 + $0xb0] sm:$0xff]
          %v250 = vld [vmem:[%s198 + $0xb8] sm:$0xff]
          %v251 = vld [vmem:[%s198 + $0xc0] sm:$0xff]
          %v252 = vld [vmem:[%s198 + $0xc8] sm:$0xff]
          %v253 = vld [vmem:[%s198 + $0xd0] sm:$0xff]
          %v254 = vld [vmem:[%s198 + $0xd8] sm:$0xff]
          %v255 = vld [vmem:[%s198 + $0xe0] sm:$0xff]
          %v256 = vld [vmem:[%s198 + $0xe8] sm:$0xff]
          %v257 = vld [vmem:[%s198 + $0xf0] sm:$0xff]
          %v258 = vld [vmem:[%s198 + $0xf8] sm:$0xff]
          %v259 = vld [vmem:[%s198 + $0x100] sm:$0xff]
          %v260 = vld [vmem:[%s198 + $0x108] sm:$0xff]
          %v261 = vld [vmem:[%s198 + $0x110] sm:$0xff]
          %v262 = vld [vmem:[%s198 + $0x118] sm:$0xff]
          %v263 = vld [vmem:[%s198 + $0x120] sm:$0xff]
          %v264 = vld [vmem:[%s198 + $0x128] sm:$0xff]
          %v265 = vld [vmem:[%s198 + $0x130] sm:$0xff]
          %v266 = vld [vmem:[%s198 + $0x138] sm:$0xff]
          %v267 = vld [vmem:[%s198 + $0x140] sm:$0xff]
          %v268 = vld [vmem:[%s198 + $0x148] sm:$0xff]
          %v269 = vld [vmem:[%s198 + $0x150] sm:$0xff]
          %v270 = vld [vmem:[%s198 + $0x158] sm:$0xff]
          %v271 = vld [vmem:[%s198 + $0x160] sm:$0xff]
          %v272 = vld [vmem:[%s198 + $0x168] sm:$0xff]
          %v273 = vld [vmem:[%s198 + $0x170] sm:$0xff]
          %v274 = vld [vmem:[%s198 + $0x178] sm:$0xff]
          %v275 = vld [vmem:[%s198 + $0x180] sm:$0xff]
          %v276 = vld [vmem:[%s198 + $0x188] sm:$0xff]
          %v277 = vld [vmem:[%s198 + $0x190] sm:$0xff]
          %v278 = vld [vmem:[%s198 + $0x198] sm:$0xff]
          %v279 = vld [vmem:[%s198 + $0x1a0] sm:$0xff]
          %v280 = vld [vmem:[%s198 + $0x1a8] sm:$0xff]
          %v281 = vld [vmem:[%s198 + $0x1b0] sm:$0xff]
          %v282 = vld [vmem:[%s198 + $0x1b8] sm:$0xff]
          %v283 = vld [vmem:[%s198 + $0x1c0] sm:$0xff]
          %v284 = vld [vmem:[%s198 + $0x1c8] sm:$0xff]
          %v285 = vld [vmem:[%s198 + $0x1d0] sm:$0xff]
          %v286 = vld [vmem:[%s198 + $0x1d8] sm:$0xff]
          %v287 = vld [vmem:[%s198 + $0x1e0] sm:$0xff]
          %v288 = vld [vmem:[%s198 + $0x1e8] sm:$0xff]
          %v289 = vld [vmem:[%s198 + $0x1f0] sm:$0xff]
          %v290 = vld [vmem:[%s198 + $0x1f8] sm:$0xff]
          %v291 = vld [vmem:[%s198 + $0x200] sm:$0xff]
          %v292 = vld [vmem:[%s198 + $0x208] sm:$0xff]
          %v293 = vld [vmem:[%s198 + $0x210] sm:$0xff]
          %v294 = vld [vmem:[%s198 + $0x218] sm:$0xff]
          %v295 = vld [vmem:[%s198 + $0x220] sm:$0xff]
          %v296 = vld [vmem:[%s198 + $0x228] sm:$0xff]
          %v297 = vld [vmem:[%s198 + $0x230] sm:$0xff]
          %v298 = vld [vmem:[%s198 + $0x238] sm:$0xff]
          %v299 = vld [vmem:[%s198 + $0x240] sm:$0xff]
          %v300 = vld [vmem:[%s198 + $0x248] sm:$0xff]
          %v301 = vld [vmem:[%s198 + $0x250] sm:$0xff]
          %v302 = vld [vmem:[%s198 + $0x258] sm:$0xff]
          %v303 = vld [vmem:[%s198 + $0x260] sm:$0xff]
          %v304 = vld [vmem:[%s198 + $0x268] sm:$0xff]
          %v305 = vld [vmem:[%s198 + $0x270] sm:$0xff]
          %v306 = vld [vmem:[%s198 + $0x278] sm:$0xff]
          %v307 = vld [vmem:[%s198 + $0x280] sm:$0xff]
          %v308 = vld [vmem:[%s198 + $0x288] sm:$0xff]
          %v309 = vld [vmem:[%s198 + $0x290] sm:$0xff]
          %v310 = vld [vmem:[%s198 + $0x298] sm:$0xff]
          %v311 = vld [vmem:[%s198 + $0x2a0] sm:$0xff]
          %v312 = vld [vmem:[%s198 + $0x2a8] sm:$0xff]
          %v313 = vld [vmem:[%s198 + $0x2b0] sm:$0xff]
          %v314 = vld [vmem:[%s198 + $0x2b8] sm:$0xff]
          %v315 = vld [vmem:[%s198 + $0x2c0] sm:$0xff]
          %v316 = vld [vmem:[%s198 + $0x2c8] sm:$0xff]
          %v317 = vld [vmem:[%s198 + $0x2d0] sm:$0xff]
          %v318 = vld [vmem:[%s198 + $0x2d8] sm:$0xff]
          %v319 = vld [vmem:[%s198 + $0x2e0] sm:$0xff]
          %v320 = vld [vmem:[%s198 + $0x2e8] sm:$0xff]
          %v321 = vld [vmem:[%s198 + $0x2f0] sm:$0xff]
          %v322 = vld [vmem:[%s198 + $0x2f8] sm:$0xff]
          %v323 = vld [vmem:[%s198 + $0x300] sm:$0xff]
          %v324 = vld [vmem:[%s198 + $0x308] sm:$0xff]
          %v325 = vld [vmem:[%s198 + $0x310] sm:$0xff]
          %v326 = vld [vmem:[%s198 + $0x318] sm:$0xff]
          %v327 = vld [vmem:[%s198 + $0x320] sm:$0xff]
          %v328 = vld [vmem:[%s198 + $0x328] sm:$0xff]
          %v329 = vld [vmem:[%s198 + $0x330] sm:$0xff]
          %v330 = vld [vmem:[%s198 + $0x338] sm:$0xff]
          %v331 = vld [vmem:[%s198 + $0x340] sm:$0xff]
          %v332 = vld [vmem:[%s198 + $0x348] sm:$0xff]
          %v333 = vld [vmem:[%s198 + $0x350] sm:$0xff]
          %v334 = vld [vmem:[%s198 + $0x358] sm:$0xff]
          %v335 = vld [vmem:[%s198 + $0x360] sm:$0xff]
          %v336 = vld [vmem:[%s198 + $0x368] sm:$0xff]
          %v337 = vld [vmem:[%s198 + $0x370] sm:$0xff]
          %v338 = vld [vmem:[%s198 + $0x378] sm:$0xff]
          %v339 = vld [vmem:[%s198 + $0x380] sm:$0xff]
          %v340 = vld [vmem:[%s198 + $0x388] sm:$0xff]
          %v341 = vld [vmem:[%s198 + $0x390] sm:$0xff]
          %v342 = vld [vmem:[%s198 + $0x398] sm:$0xff]
          %v343 = vld [vmem:[%s198 + $0x3a0] sm:$0xff]
          %v344 = vld [vmem:[%s198 + $0x3a8] sm:$0xff]
          %v345 = vld [vmem:[%s198 + $0x3b0] sm:$0xff]
          %v346 = vld [vmem:[%s198 + $0x3b8] sm:$0xff]
          %v347 = vld [vmem:[%s198 + $0x3c0] sm:$0xff]
          %v348 = vld [vmem:[%s198 + $0x3c8] sm:$0xff]
          %v349 = vld [vmem:[%s198 + $0x3d0] sm:$0xff]
          %v350 = vld [vmem:[%s198 + $0x3d8] sm:$0xff]
          %v351 = vld [vmem:[%s198 + $0x3e0] sm:$0xff]
          %v352 = vld [vmem:[%s198 + $0x3e8] sm:$0xff]
          %v353 = vld [vmem:[%s198 + $0x3f0] sm:$0xff]
          %v354 = vld [vmem:[%s198 + $0x3f8] sm:$0xff]
          %v355 = vmul.f32 %v227, %v227
          %v356 = vmul.f32 %v228, %v228
          %v357 = vmul.f32 %v229, %v229
          %v358 = vmul.f32 %v230, %v230
          %v359 = vmul.f32 %v231, %v231
          %v360 = vmul.f32 %v232, %v232
          %v361 = vmul.f32 %v233, %v233
          %v362 = vmul.f32 %v234, %v234
          %v363 = vmul.f32 %v235, %v235
          %v364 = vmul.f32 %v236, %v236
          %v365 = vmul.f32 %v237, %v237
          %v366 = vmul.f32 %v238, %v238
          %v367 = vmul.f32 %v239, %v239
          %v368 = vmul.f32 %v240, %v240
          %v369 = vmul.f32 %v241, %v241
          %v370 = vmul.f32 %v242, %v242
          %v371 = vmul.f32 %v243, %v243
          %v372 = vmul.f32 %v244, %v244
          %v373 = vmul.f32 %v245, %v245
          %v374 = vmul.f32 %v246, %v246
          %v375 = vmul.f32 %v247, %v247
          %v376 = vmul.f32 %v248, %v248
          %v377 = vmul.f32 %v249, %v249
          %v378 = vmul.f32 %v250, %v250
          %v379 = vmul.f32 %v251, %v251
          %v380 = vmul.f32 %v252, %v252
          %v381 = vmul.f32 %v253, %v253
          %v382 = vmul.f32 %v254, %v254
          %v383 = vmul.f32 %v255, %v255
          %v384 = vmul.f32 %v256, %v256
          %v385 = vmul.f32 %v257, %v257
          %v386 = vmul.f32 %v258, %v258
          %v387 = vmul.f32 %v259, %v259
          %v388 = vmul.f32 %v260, %v260
          %v389 = vmul.f32 %v261, %v261
          %v390 = vmul.f32 %v262, %v262
          %v391 = vmul.f32 %v263, %v263
          %v392 = vmul.f32 %v264, %v264
          %v393 = vmul.f32 %v265, %v265
          %v394 = vmul.f32 %v266, %v266
          %v395 = vmul.f32 %v267, %v267
          %v396 = vmul.f32 %v268, %v268
          %v397 = vmul.f32 %v269, %v269
          %v398 = vmul.f32 %v270, %v270
          %v399 = vmul.f32 %v271, %v271
          %v400 = vmul.f32 %v272, %v272
          %v401 = vmul.f32 %v273, %v273
          %v402 = vmul.f32 %v274, %v274
          %v403 = vmul.f32 %v275, %v275
          %v404 = vmul.f32 %v276, %v276
          %v405 = vmul.f32 %v277, %v277
          %v406 = vmul.f32 %v278, %v278
          %v407 = vmul.f32 %v279, %v279
          %v408 = vmul.f32 %v280, %v280
          %v409 = vmul.f32 %v281, %v281
          %v410 = vmul.f32 %v282, %v282
          %v411 = vmul.f32 %v283, %v283
          %v412 = vmul.f32 %v284, %v284
          %v413 = vmul.f32 %v285, %v285
          %v414 = vmul.f32 %v286, %v286
          %v415 = vmul.f32 %v287, %v287
          %v416 = vmul.f32 %v288, %v288
          %v417 = vmul.f32 %v289, %v289
          %v418 = vmul.f32 %v290, %v290
          %v419 = vmul.f32 %v291, %v291
          %v420 = vmul.f32 %v292, %v292
          %v421 = vmul.f32 %v293, %v293
          %v422 = vmul.f32 %v294, %v294
          %v423 = vmul.f32 %v295, %v295
          %v424 = vmul.f32 %v296, %v296
          %v425 = vmul.f32 %v297, %v297
          %v426 = vmul.f32 %v298, %v298
          %v427 = vmul.f32 %v299, %v299
          %v428 = vmul.f32 %v300, %v300
          %v429 = vmul.f32 %v301, %v301
          %v430 = vmul.f32 %v302, %v302
          %v431 = vmul.f32 %v303, %v303
          %v432 = vmul.f32 %v304, %v304
          %v433 = vmul.f32 %v305, %v305
          %v434 = vmul.f32 %v306, %v306
          %v435 = vmul.f32 %v307, %v307
          %v436 = vmul.f32 %v308, %v308
          %v437 = vmul.f32 %v309, %v309
          %v438 = vmul.f32 %v310, %v310
          %v439 = vmul.f32 %v311, %v311
          %v440 = vmul.f32 %v312, %v312
          %v441 = vmul.f32 %v313, %v313
          %v442 = vmul.f32 %v314, %v314
          %v443 = vmul.f32 %v315, %v315
          %v444 = vmul.f32 %v316, %v316
          %v445 = vmul.f32 %v317, %v317
          %v446 = vmul.f32 %v318, %v318
          %v447 = vmul.f32 %v319, %v319
          %v448 = vmul.f32 %v320, %v320
          %v449 = vmul.f32 %v321, %v321
          %v450 = vmul.f32 %v322, %v322
          %v451 = vmul.f32 %v323, %v323
          %v452 = vmul.f32 %v324, %v324
          %v453 = vmul.f32 %v325, %v325
          %v454 = vmul.f32 %v326, %v326
          %v455 = vmul.f32 %v327, %v327
          %v456 = vmul.f32 %v328, %v328
          %v457 = vmul.f32 %v329, %v329
          %v458 = vmul.f32 %v330, %v330
          %v459 = vmul.f32 %v331, %v331
          %v460 = vmul.f32 %v332, %v332
          %v461 = vmul.f32 %v333, %v333
          %v462 = vmul.f32 %v334, %v334
          %v463 = vmul.f32 %v335, %v335
          %v464 = vmul.f32 %v336, %v336
          %v465 = vmul.f32 %v337, %v337
          %v466 = vmul.f32 %v338, %v338
          %v467 = vmul.f32 %v339, %v339
          %v468 = vmul.f32 %v340, %v340
          %v469 = vmul.f32 %v341, %v341
          %v470 = vmul.f32 %v342, %v342
          %v471 = vmul.f32 %v343, %v343
          %v472 = vmul.f32 %v344, %v344
          %v473 = vmul.f32 %v345, %v345
          %v474 = vmul.f32 %v346, %v346
          %v475 = vmul.f32 %v347, %v347
          %v476 = vmul.f32 %v348, %v348
          %v477 = vmul.f32 %v349, %v349
          %v478 = vmul.f32 %v350, %v350
          %v479 = vmul.f32 %v351, %v351
          %v480 = vmul.f32 %v352, %v352
          %v481 = vmul.f32 %v353, %v353
          %v482 = vmul.f32 %v354, %v354
          %v483 = vadd.f32 %v355, %v363
          %v484 = vadd.f32 %v483, %v371
          %v485 = vadd.f32 %v484, %v379
          %v486 = vadd.f32 %v485, %v387
          %v487 = vadd.f32 %v486, %v395
          %v488 = vadd.f32 %v487, %v403
          %v489 = vadd.f32 %v488, %v411
          %v490 = vadd.f32 %v489, %v419
          %v491 = vadd.f32 %v490, %v427
          %v492 = vadd.f32 %v491, %v435
          %v493 = vadd.f32 %v492, %v443
          %v494 = vadd.f32 %v493, %v451
          %v495 = vadd.f32 %v494, %v459
          %v496 = vadd.f32 %v495, %v467
          %v497 = vadd.f32 %v496, %v475
          %v498 = vrot.slane %v497, 4
          %v499 = vadd.f32 %v497, %v498
          %v500 = vrot.slane %v499, 2
          %v501 = vadd.f32 %v499, %v500
          %v502 = vrot.slane %v501, 1
          %v503 = vadd.f32 %v501, %v502
          %v504 = vadd.f32 %v356, %v364
          %v505 = vadd.f32 %v504, %v372
          %v506 = vadd.f32 %v505, %v380
          %v507 = vadd.f32 %v506, %v388
          %v508 = vadd.f32 %v507, %v396
          %v509 = vadd.f32 %v508, %v404
          %v510 = vadd.f32 %v509, %v412
          %v511 = vadd.f32 %v510, %v420
          %v512 = vadd.f32 %v511, %v428
          %v513 = vadd.f32 %v512, %v436
          %v514 = vadd.f32 %v513, %v444
          %v515 = vadd.f32 %v514, %v452
          %v516 = vadd.f32 %v515, %v460
          %v517 = vadd.f32 %v516, %v468
          %v518 = vadd.f32 %v517, %v476
          %v519 = vrot.slane %v518, 4
          %v520 = vadd.f32 %v518, %v519
          %v521 = vrot.slane %v520, 2
          %v522 = vadd.f32 %v520, %v521
          %v523 = vrot.slane %v522, 1
          %v524 = vadd.f32 %v522, %v523
          %v525 = vadd.f32 %v357, %v365
          %v526 = vadd.f32 %v525, %v373
          %v527 = vadd.f32 %v526, %v381
          %v528 = vadd.f32 %v527, %v389
          %v529 = vadd.f32 %v528, %v397
          %v530 = vadd.f32 %v529, %v405
          %v531 = vadd.f32 %v530, %v413
          %v532 = vadd.f32 %v531, %v421
          %v533 = vadd.f32 %v532, %v429
          %v534 = vadd.f32 %v533, %v437
          %v535 = vadd.f32 %v534, %v445
          %v536 = vadd.f32 %v535, %v453
          %v537 = vadd.f32 %v536, %v461
          %v538 = vadd.f32 %v537, %v469
          %v539 = vadd.f32 %v538, %v477
          %v540 = vrot.slane %v539, 4
          %v541 = vadd.f32 %v539, %v540
          %v542 = vrot.slane %v541, 2
          %v543 = vadd.f32 %v541, %v542
          %v544 = vrot.slane %v543, 1
          %v545 = vadd.f32 %v543, %v544
          %v546 = vadd.f32 %v358, %v366
          %v547 = vadd.f32 %v546, %v374
          %v548 = vadd.f32 %v547, %v382
          %v549 = vadd.f32 %v548, %v390
          %v550 = vadd.f32 %v549, %v398
          %v551 = vadd.f32 %v550, %v406
          %v552 = vadd.f32 %v551, %v414
          %v553 = vadd.f32 %v552, %v422
          %v554 = vadd.f32 %v553, %v430
          %v555 = vadd.f32 %v554, %v438
          %v556 = vadd.f32 %v555, %v446
          %v557 = vadd.f32 %v556, %v454
          %v558 = vadd.f32 %v557, %v462
          %v559 = vadd.f32 %v558, %v470
          %v560 = vadd.f32 %v559, %v478
          %v561 = vrot.slane %v560, 4
          %v562 = vadd.f32 %v560, %v561
          %v563 = vrot.slane %v562, 2
          %v564 = vadd.f32 %v562, %v563
          %v565 = vrot.slane %v564, 1
          %v566 = vadd.f32 %v564, %v565
          %v567 = vadd.f32 %v359, %v367
          %v568 = vadd.f32 %v567, %v375
          %v569 = vadd.f32 %v568, %v383
          %v570 = vadd.f32 %v569, %v391
          %v571 = vadd.f32 %v570, %v399
          %v572 = vadd.f32 %v571, %v407
          %v573 = vadd.f32 %v572, %v415
          %v574 = vadd.f32 %v573, %v423
          %v575 = vadd.f32 %v574, %v431
          %v576 = vadd.f32 %v575, %v439
          %v577 = vadd.f32 %v576, %v447
          %v578 = vadd.f32 %v577, %v455
          %v579 = vadd.f32 %v578, %v463
          %v580 = vadd.f32 %v579, %v471
          %v581 = vadd.f32 %v580, %v479
          %v582 = vrot.slane %v581, 4
          %v583 = vadd.f32 %v581, %v582
          %v584 = vrot.slane %v583, 2
          %v585 = vadd.f32 %v583, %v584
          %v586 = vrot.slane %v585, 1
          %v587 = vadd.f32 %v585, %v586
          %v588 = vadd.f32 %v360, %v368
          %v589 = vadd.f32 %v588, %v376
          %v590 = vadd.f32 %v589, %v384
          %v591 = vadd.f32 %v590, %v392
          %v592 = vadd.f32 %v591, %v400
          %v593 = vadd.f32 %v592, %v408
          %v594 = vadd.f32 %v593, %v416
          %v595 = vadd.f32 %v594, %v424
          %v596 = vadd.f32 %v595, %v432
          %v597 = vadd.f32 %v596, %v440
          %v598 = vadd.f32 %v597, %v448
          %v599 = vadd.f32 %v598, %v456
          %v600 = vadd.f32 %v599, %v464
          %v601 = vadd.f32 %v600, %v472
          %v602 = vadd.f32 %v601, %v480
          %v603 = vrot.slane %v602, 4
          %v604 = vadd.f32 %v602, %v603
          %v605 = vrot.slane %v604, 2
          %v606 = vadd.f32 %v604, %v605
          %v607 = vrot.slane %v606, 1
          %v608 = vadd.f32 %v606, %v607
          %v609 = vadd.f32 %v361, %v369
          %v610 = vadd.f32 %v609, %v377
          %v611 = vadd.f32 %v610, %v385
          %v612 = vadd.f32 %v611, %v393
          %v613 = vadd.f32 %v612, %v401
          %v614 = vadd.f32 %v613, %v409
          %v615 = vadd.f32 %v614, %v417
          %v616 = vadd.f32 %v615, %v425
          %v617 = vadd.f32 %v616, %v433
          %v618 = vadd.f32 %v617, %v441
          %v619 = vadd.f32 %v618, %v449
          %v620 = vadd.f32 %v619, %v457
          %v621 = vadd.f32 %v620, %v465
          %v622 = vadd.f32 %v621, %v473
          %v623 = vadd.f32 %v622, %v481
          %v624 = vrot.slane %v623, 4
          %v625 = vadd.f32 %v623, %v624
          %v626 = vrot.slane %v625, 2
          %v627 = vadd.f32 %v625, %v626
          %v628 = vrot.slane %v627, 1
          %v629 = vadd.f32 %v627, %v628
          %v630 = vadd.f32 %v362, %v370
          %v631 = vadd.f32 %v630, %v378
          %v632 = vadd.f32 %v631, %v386
          %v633 = vadd.f32 %v632, %v394
          %v634 = vadd.f32 %v633, %v402
          %v635 = vadd.f32 %v634, %v410
          %v636 = vadd.f32 %v635, %v418
          %v637 = vadd.f32 %v636, %v426
          %v638 = vadd.f32 %v637, %v434
          %v639 = vadd.f32 %v638, %v442
          %v640 = vadd.f32 %v639, %v450
          %v641 = vadd.f32 %v640, %v458
          %v642 = vadd.f32 %v641, %v466
          %v643 = vadd.f32 %v642, %v474
          %v644 = vadd.f32 %v643, %v482
          %v645 = vrot.slane %v644, 4
          %v646 = vadd.f32 %v644, %v645
          %v647 = vrot.slane %v646, 2
          %v648 = vadd.f32 %v646, %v647
          %v649 = vrot.slane %v648, 1
          %v650 = vadd.f32 %v648, %v649
          %v651 = vrsqrt.pop %v503
          %v652 = vrsqrt.pop %v524
          %v653 = vrsqrt.pop %v545
          %v654 = vrsqrt.pop %v566
          %v655 = vrsqrt.pop %v587
          %v656 = vrsqrt.pop %v608
          %v657 = vrsqrt.pop %v629
          %v658 = vrsqrt.pop %v650
          %v667 = vcombine.low %v651, %v652
          %v668 = vcombine.low %v653, %v654
          %v669 = vcombine.low %v655, %v656
          %v670 = vcombine.low %v657, %v658
          %v672 = vunpack.c.l.s4 1966171168
          %v673 = vunpack.c.0.s8 %v672
          %v674 = vlaneseq
          %v675 = vshrl.u32 %v674, 7
          %v676 = vsub.s32 %v673, %v675
          %v677 = vrot.slane %v667, %v676
          %v679 = vunpack.c.l.s4 1966171168
          %v680 = vunpack.c.0.s8 %v679
          %v681 = vlaneseq
          %v682 = vshrl.u32 %v681, 7
          %v683 = vsub.s32 %v680, %v682
          %v684 = vrot.slane %v668, %v683
          %v686 = vunpack.c.l.s4 1966171168
          %v687 = vunpack.c.0.s8 %v686
          %v688 = vlaneseq
          %v689 = vshrl.u32 %v688, 7
          %v690 = vsub.s32 %v687, %v689
          %v691 = vrot.slane %v669, %v690
          %v693 = vunpack.c.l.s4 1966171168
          %v694 = vunpack.c.0.s8 %v693
          %v695 = vlaneseq
          %v696 = vshrl.u32 %v695, 7
          %v697 = vsub.s32 %v694, %v696
          %v698 = vrot.slane %v670, %v697
          %v699 = vcombine.low %v677, %v684
          %v700 = vcombine.low %v691, %v698
          %v702 = vunpack.c.l.s4 1966171168
          %v703 = vunpack.c.0.s8 %v702
          %v704 = vlaneseq
          %v705 = vshrl.u32 %v704, 7
          %v706 = vsub.s32 %v703, %v705
          %v707 = vrot.slane %v699, %v706
          %v709 = vunpack.c.l.s4 1966171168
          %v710 = vunpack.c.0.s8 %v709
          %v711 = vlaneseq
          %v712 = vshrl.u32 %v711, 7
          %v713 = vsub.s32 %v710, %v712
          %v714 = vrot.slane %v700, %v713
          %v715 = vcombine.low %v707, %v714
          %717 = vst [vmem:[#allocation2] sm:$0xff] %v715
        $region44: #{tpu_custom_call.1} parent=31 // pred_fallthru
          _
        %s718 = smul.u32 %s31, 8
        %s719 = scalar_lea.vmem [#allocation5], %s718
        %v720 = vld [vmem:[%s719] sm:$0xff]
        %s721 = scalar_lea.vmem %s1, %s718
        %v722 = vld [vmem:[%s721] sm:$0xff]
        %v723 = vld [vmem:[%s198] sm:$0xff]
        %v724 = vld [vmem:[%s198 + $0x8] sm:$0xff]
        %v725 = vld [vmem:[%s198 + $0x10] sm:$0xff]
        %v726 = vld [vmem:[%s198 + $0x18] sm:$0xff]
        %v727 = vld [vmem:[%s198 + $0x20] sm:$0xff]
        %v728 = vld [vmem:[%s198 + $0x28] sm:$0xff]
        %v729 = vld [vmem:[%s198 + $0x30] sm:$0xff]
        %v730 = vld [vmem:[%s198 + $0x38] sm:$0xff]
        %v731 = vld [vmem:[%s198 + $0x40] sm:$0xff]
        %v732 = vld [vmem:[%s198 + $0x48] sm:$0xff]
        %v733 = vld [vmem:[%s198 + $0x50] sm:$0xff]
        %v734 = vld [vmem:[%s198 + $0x58] sm:$0xff]
        %v735 = vld [vmem:[%s198 + $0x60] sm:$0xff]
        %v736 = vld [vmem:[%s198 + $0x68] sm:$0xff]
        %v737 = vld [vmem:[%s198 + $0x70] sm:$0xff]
        %v738 = vld [vmem:[%s198 + $0x78] sm:$0xff]
        %v739 = vld [vmem:[%s198 + $0x80] sm:$0xff]
        %v740 = vld [vmem:[%s198 + $0x88] sm:$0xff]
        %v741 = vld [vmem:[%s198 + $0x90] sm:$0xff]
        %v742 = vld [vmem:[%s198 + $0x98] sm:$0xff]
        %v743 = vld [vmem:[%s198 + $0xa0] sm:$0xff]
        %v744 = vld [vmem:[%s198 + $0xa8] sm:$0xff]
        %v745 = vld [vmem:[%s198 + $0xb0] sm:$0xff]
        %v746 = vld [vmem:[%s198 + $0xb8] sm:$0xff]
        %v747 = vld [vmem:[%s198 + $0xc0] sm:$0xff]
        %v748 = vld [vmem:[%s198 + $0xc8] sm:$0xff]
        %v749 = vld [vmem:[%s198 + $0xd0] sm:$0xff]
        %v750 = vld [vmem:[%s198 + $0xd8] sm:$0xff]
        %v751 = vld [vmem:[%s198 + $0xe0] sm:$0xff]
        %v752 = vld [vmem:[%s198 + $0xe8] sm:$0xff]
        %v753 = vld [vmem:[%s198 + $0xf0] sm:$0xff]
        %v754 = vld [vmem:[%s198 + $0xf8] sm:$0xff]
        %v755 = vld [vmem:[%s198 + $0x100] sm:$0xff]
        %v756 = vld [vmem:[%s198 + $0x108] sm:$0xff]
        %v757 = vld [vmem:[%s198 + $0x110] sm:$0xff]
        %v758 = vld [vmem:[%s198 + $0x118] sm:$0xff]
        %v759 = vld [vmem:[%s198 + $0x120] sm:$0xff]
        %v760 = vld [vmem:[%s198 + $0x128] sm:$0xff]
        %v761 = vld [vmem:[%s198 + $0x130] sm:$0xff]
        %v762 = vld [vmem:[%s198 + $0x138] sm:$0xff]
        %v763 = vld [vmem:[%s198 + $0x140] sm:$0xff]
        %v764 = vld [vmem:[%s198 + $0x148] sm:$0xff]
        %v765 = vld [vmem:[%s198 + $0x150] sm:$0xff]
        %v766 = vld [vmem:[%s198 + $0x158] sm:$0xff]
        %v767 = vld [vmem:[%s198 + $0x160] sm:$0xff]
        %v768 = vld [vmem:[%s198 + $0x168] sm:$0xff]
        %v769 = vld [vmem:[%s198 + $0x170] sm:$0xff]
        %v770 = vld [vmem:[%s198 + $0x178] sm:$0xff]
        %v771 = vld [vmem:[%s198 + $0x180] sm:$0xff]
        %v772 = vld [vmem:[%s198 + $0x188] sm:$0xff]
        %v773 = vld [vmem:[%s198 + $0x190] sm:$0xff]
        %v774 = vld [vmem:[%s198 + $0x198] sm:$0xff]
        %v775 = vld [vmem:[%s198 + $0x1a0] sm:$0xff]
        %v776 = vld [vmem:[%s198 + $0x1a8] sm:$0xff]
        %v777 = vld [vmem:[%s198 + $0x1b0] sm:$0xff]
        %v778 = vld [vmem:[%s198 + $0x1b8] sm:$0xff]
        %v779 = vld [vmem:[%s198 + $0x1c0] sm:$0xff]
        %v780 = vld [vmem:[%s198 + $0x1c8] sm:$0xff]
        %v781 = vld [vmem:[%s198 + $0x1d0] sm:$0xff]
        %v782 = vld [vmem:[%s198 + $0x1d8] sm:$0xff]
        %v783 = vld [vmem:[%s198 + $0x1e0] sm:$0xff]
        %v784 = vld [vmem:[%s198 + $0x1e8] sm:$0xff]
        %v785 = vld [vmem:[%s198 + $0x1f0] sm:$0xff]
        %v786 = vld [vmem:[%s198 + $0x1f8] sm:$0xff]
        %v787 = vld [vmem:[%s198 + $0x200] sm:$0xff]
        %v788 = vld [vmem:[%s198 + $0x208] sm:$0xff]
        %v789 = vld [vmem:[%s198 + $0x210] sm:$0xff]
        %v790 = vld [vmem:[%s198 + $0x218] sm:$0xff]
        %v791 = vld [vmem:[%s198 + $0x220] sm:$0xff]
        %v792 = vld [vmem:[%s198 + $0x228] sm:$0xff]
        %v793 = vld [vmem:[%s198 + $0x230] sm:$0xff]
        %v794 = vld [vmem:[%s198 + $0x238] sm:$0xff]
        %v795 = vld [vmem:[%s198 + $0x240] sm:$0xff]
        %v796 = vld [vmem:[%s198 + $0x248] sm:$0xff]
        %v797 = vld [vmem:[%s198 + $0x250] sm:$0xff]
        %v798 = vld [vmem:[%s198 + $0x258] sm:$0xff]
        %v799 = vld [vmem:[%s198 + $0x260] sm:$0xff]
        %v800 = vld [vmem:[%s198 + $0x268] sm:$0xff]
        %v801 = vld [vmem:[%s198 + $0x270] sm:$0xff]
        %v802 = vld [vmem:[%s198 + $0x278] sm:$0xff]
        %v803 = vld [vmem:[%s198 + $0x280] sm:$0xff]
        %v804 = vld [vmem:[%s198 + $0x288] sm:$0xff]
        %v805 = vld [vmem:[%s198 + $0x290] sm:$0xff]
        %v806 = vld [vmem:[%s198 + $0x298] sm:$0xff]
        %v807 = vld [vmem:[%s198 + $0x2a0] sm:$0xff]
        %v808 = vld [vmem:[%s198 + $0x2a8] sm:$0xff]
        %v809 = vld [vmem:[%s198 + $0x2b0] sm:$0xff]
        %v810 = vld [vmem:[%s198 + $0x2b8] sm:$0xff]
        %v811 = vld [vmem:[%s198 + $0x2c0] sm:$0xff]
        %v812 = vld [vmem:[%s198 + $0x2c8] sm:$0xff]
        %v813 = vld [vmem:[%s198 + $0x2d0] sm:$0xff]
        %v814 = vld [vmem:[%s198 + $0x2d8] sm:$0xff]
        %v815 = vld [vmem:[%s198 + $0x2e0] sm:$0xff]
        %v816 = vld [vmem:[%s198 + $0x2e8] sm:$0xff]
        %v817 = vld [vmem:[%s198 + $0x2f0] sm:$0xff]
        %v818 = vld [vmem:[%s198 + $0x2f8] sm:$0xff]
        %v819 = vld [vmem:[%s198 + $0x300] sm:$0xff]
        %v820 = vld [vmem:[%s198 + $0x308] sm:$0xff]
        %v821 = vld [vmem:[%s198 + $0x310] sm:$0xff]
        %v822 = vld [vmem:[%s198 + $0x318] sm:$0xff]
        %v823 = vld [vmem:[%s198 + $0x320] sm:$0xff]
        %v824 = vld [vmem:[%s198 + $0x328] sm:$0xff]
        %v825 = vld [vmem:[%s198 + $0x330] sm:$0xff]
        %v826 = vld [vmem:[%s198 + $0x338] sm:$0xff]
        %v827 = vld [vmem:[%s198 + $0x340] sm:$0xff]
        %v828 = vld [vmem:[%s198 + $0x348] sm:$0xff]
        %v829 = vld [vmem:[%s198 + $0x350] sm:$0xff]
        %v830 = vld [vmem:[%s198 + $0x358] sm:$0xff]
        %v831 = vld [vmem:[%s198 + $0x360] sm:$0xff]
        %v832 = vld [vmem:[%s198 + $0x368] sm:$0xff]
        %v833 = vld [vmem:[%s198 + $0x370] sm:$0xff]
        %v834 = vld [vmem:[%s198 + $0x378] sm:$0xff]
        %v835 = vld [vmem:[%s198 + $0x380] sm:$0xff]
        %v836 = vld [vmem:[%s198 + $0x388] sm:$0xff]
        %v837 = vld [vmem:[%s198 + $0x390] sm:$0xff]
        %v838 = vld [vmem:[%s198 + $0x398] sm:$0xff]
        %v839 = vld [vmem:[%s198 + $0x3a0] sm:$0xff]
        %v840 = vld [vmem:[%s198 + $0x3a8] sm:$0xff]
        %v841 = vld [vmem:[%s198 + $0x3b0] sm:$0xff]
        %v842 = vld [vmem:[%s198 + $0x3b8] sm:$0xff]
        %v843 = vld [vmem:[%s198 + $0x3c0] sm:$0xff]
        %v844 = vld [vmem:[%s198 + $0x3c8] sm:$0xff]
        %v845 = vld [vmem:[%s198 + $0x3d0] sm:$0xff]
        %v846 = vld [vmem:[%s198 + $0x3d8] sm:$0xff]
        %v847 = vld [vmem:[%s198 + $0x3e0] sm:$0xff]
        %v848 = vld [vmem:[%s198 + $0x3e8] sm:$0xff]
        %v849 = vld [vmem:[%s198 + $0x3f0] sm:$0xff]
        %v850 = vld [vmem:[%s198 + $0x3f8] sm:$0xff]
        %851 = vmatprep.subr.mxu0 %v724
        %852 = vmatpush1.msra.mxu0 %v723
        %853 = vmatprep.subr.mxu0 %v732
        %854 = vmatpush1.msra.mxu0 %v731
        %855 = vmatprep.subr.mxu0 %v740
        %856 = vmatpush1.msra.mxu0 %v739
        %857 = vmatprep.subr.mxu0 %v748
        %858 = vmatpush1.msra.mxu0 %v747
        %859 = vmatprep.subr.mxu0 %v756
        %860 = vmatpush1.msra.mxu0 %v755
        %861 = vmatprep.subr.mxu0 %v764
        %862 = vmatpush1.msra.mxu0 %v763
        %863 = vmatprep.subr.mxu0 %v772
        %864 = vmatpush1.msra.mxu0 %v771
        %865 = vmatprep.subr.mxu0 %v780
        %866 = vmatpush1.msra.mxu0 %v779
        %867 = vmatprep.subr.mxu0 %v788
        %868 = vmatpush1.msra.mxu0 %v787
        %869 = vmatprep.subr.mxu0 %v796
        %870 = vmatpush1.msra.mxu0 %v795
        %871 = vmatprep.subr.mxu0 %v804
        %872 = vmatpush1.msra.mxu0 %v803
        %873 = vmatprep.subr.mxu0 %v812
        %874 = vmatpush1.msra.mxu0 %v811
        %875 = vmatprep.subr.mxu0 %v820
        %876 = vmatpush1.msra.mxu0 %v819
        %877 = vmatprep.subr.mxu0 %v828
        %878 = vmatpush1.msra.mxu0 %v827
        %879 = vmatprep.subr.mxu0 %v836
        %880 = vmatpush1.msra.mxu0 %v835
        %881 = vmatprep.subr.mxu0 %v844
        %882 = vmatpush1.msra.mxu0 %v843
        %883 = vmatprep.subr.mxu0 0.0
        %884 = vmatpush1.msra.mxu0 0.0
        %885 = vmatprep.subr.mxu0 0.0
        %886 = vmatpush1.msra.mxu0 0.0
        %887 = vmatprep.subr.mxu0 0.0
        %888 = vmatpush1.msra.mxu0 0.0
        %889 = vmatprep.subr.mxu0 0.0
        %890 = vmatpush1.msra.mxu0 0.0
        %891 = vmatprep.subr.mxu0 0.0
        %892 = vmatpush1.msra.mxu0 0.0
        %893 = vmatprep.subr.mxu0 0.0
        %894 = vmatpush1.msra.mxu0 0.0
        %895 = vmatprep.subr.mxu0 0.0
        %896 = vmatpush1.msra.mxu0 0.0
        %897 = vmatprep.subr.mxu0 0.0
        %898 = vmatpush1.msra.mxu0 0.0
        %899 = vmatprep.subr.mxu0 0.0
        %900 = vmatpush1.msra.mxu0 0.0
        %901 = vmatprep.subr.mxu0 0.0
        %902 = vmatpush1.msra.mxu0 0.0
        %903 = vmatprep.subr.mxu0 0.0
        %904 = vmatpush1.msra.mxu0 0.0
        %905 = vmatprep.subr.mxu0 0.0
        %906 = vmatpush1.msra.mxu0 0.0
        %907 = vmatprep.subr.mxu0 0.0
        %908 = vmatpush1.msra.mxu0 0.0
        %909 = vmatprep.subr.mxu0 0.0
        %910 = vmatpush1.msra.mxu0 0.0
        %911 = vmatprep.subr.mxu0 0.0
        %912 = vmatpush1.msra.mxu0 0.0
        %913 = vmatprep.subr.mxu0 0.0
        %914 = vmatpush1.msra.mxu0 0.0
        %915 = vmatprep.mubr.f32.mxu0 0.0
        %916 = vmatmul.mubr.f32.gmra.mrb[0].mxu0 %v720
        %v917 = vpop.f32.mrb[0].mxu0
        %v918 = vadd.f32 0.0, %v917
        %v919 = vpop.f32.mrb[0].mxu0
        %v920 = vadd.f32 0.0, %v919
        %921 = vdwg.mxu0
        %922 = vmatprep.subr.mxu0 %v726
        %923 = vmatpush1.msra.mxu0 %v725
        %924 = vmatprep.subr.mxu0 %v734
        %925 = vmatpush1.msra.mxu0 %v733
        %926 = vmatprep.subr.mxu0 %v742
        %927 = vmatpush1.msra.mxu0 %v741
        %928 = vmatprep.subr.mxu0 %v750
        %929 = vmatpush1.msra.mxu0 %v749
        %930 = vmatprep.subr.mxu0 %v758
        %931 = vmatpush1.msra.mxu0 %v757
        %932 = vmatprep.subr.mxu0 %v766
        %933 = vmatpush1.msra.mxu0 %v765
        %934 = vmatprep.subr.mxu0 %v774
        %935 = vmatpush1.msra.mxu0 %v773
        %936 = vmatprep.subr.mxu0 %v782
        %937 = vmatpush1.msra.mxu0 %v781
        %938 = vmatprep.subr.mxu0 %v790
        %939 = vmatpush1.msra.mxu0 %v789
        %940 = vmatprep.subr.mxu0 %v798
        %941 = vmatpush1.msra.mxu0 %v797
        %942 = vmatprep.subr.mxu0 %v806
        %943 = vmatpush1.msra.mxu0 %v805
        %944 = vmatprep.subr.mxu0 %v814
        %945 = vmatpush1.msra.mxu0 %v813
        %946 = vmatprep.subr.mxu0 %v822
        %947 = vmatpush1.msra.mxu0 %v821
        %948 = vmatprep.subr.mxu0 %v830
        %949 = vmatpush1.msra.mxu0 %v829
        %950 = vmatprep.subr.mxu0 %v838
        %951 = vmatpush1.msra.mxu0 %v837
        %952 = vmatprep.subr.mxu0 %v846
        %953 = vmatpush1.msra.mxu0 %v845
        %954 = vmatprep.subr.mxu0 0.0
        %955 = vmatpush1.msra.mxu0 0.0
        %956 = vmatprep.subr.mxu0 0.0
        %957 = vmatpush1.msra.mxu0 0.0
        %958 = vmatprep.subr.mxu0 0.0
        %959 = vmatpush1.msra.mxu0 0.0
        %960 = vmatprep.subr.mxu0 0.0
        %961 = vmatpush1.msra.mxu0 0.0
        %962 = vmatprep.subr.mxu0 0.0
        %963 = vmatpush1.msra.mxu0 0.0
        %964 = vmatprep.subr.mxu0 0.0
        %965 = vmatpush1.msra.mxu0 0.0
        %966 = vmatprep.subr.mxu0 0.0
        %967 = vmatpush1.msra.mxu0 0.0
        %968 = vmatprep.subr.mxu0 0.0
        %969 = vmatpush1.msra.mxu0 0.0
        %970 = vmatprep.subr.mxu0 0.0
        %971 = vmatpush1.msra.mxu0 0.0
        %972 = vmatprep.subr.mxu0 0.0
        %973 = vmatpush1.msra.mxu0 0.0
        %974 = vmatprep.subr.mxu0 0.0
        %975 = vmatpush1.msra.mxu0 0.0
        %976 = vmatprep.subr.mxu0 0.0
        %977 = vmatpush1.msra.mxu0 0.0
        %978 = vmatprep.subr.mxu0 0.0
        %979 = vmatpush1.msra.mxu0 0.0
        %980 = vmatprep.subr.mxu0 0.0
        %981 = vmatpush1.msra.mxu0 0.0
        %982 = vmatprep.subr.mxu0 0.0
        %983 = vmatpush1.msra.mxu0 0.0
        %984 = vmatprep.subr.mxu0 0.0
        %985 = vmatpush1.msra.mxu0 0.0
        %986 = vmatprep.mubr.f32.mxu0 0.0
        %987 = vmatmul.mubr.f32.gmra.mrb[0].mxu0 %v720
        %v988 = vpop.f32.mrb[0].mxu0
        %v989 = vadd.f32 0.0, %v988
        %v990 = vpop.f32.mrb[0].mxu0
        %v991 = vadd.f32 0.0, %v990
        %992 = vdwg.mxu0
        %993 = vmatprep.subr.mxu0 %v728
        %994 = vmatpush1.msra.mxu0 %v727
        %995 = vmatprep.subr.mxu0 %v736
        %996 = vmatpush1.msra.mxu0 %v735
        %997 = vmatprep.subr.mxu0 %v744
        %998 = vmatpush1.msra.mxu0 %v743
        %999 = vmatprep.subr.mxu0 %v752
        %1000 = vmatpush1.msra.mxu0 %v751
        %1001 = vmatprep.subr.mxu0 %v760
        %1002 = vmatpush1.msra.mxu0 %v759
        %1003 = vmatprep.subr.mxu0 %v768
        %1004 = vmatpush1.msra.mxu0 %v767
        %1005 = vmatprep.subr.mxu0 %v776
        %1006 = vmatpush1.msra.mxu0 %v775
        %1007 = vmatprep.subr.mxu0 %v784
        %1008 = vmatpush1.msra.mxu0 %v783
        %1009 = vmatprep.subr.mxu0 %v792
        %1010 = vmatpush1.msra.mxu0 %v791
        %1011 = vmatprep.subr.mxu0 %v800
        %1012 = vmatpush1.msra.mxu0 %v799
        %1013 = vmatprep.subr.mxu0 %v808
        %1014 = vmatpush1.msra.mxu0 %v807
        %1015 = vmatprep.subr.mxu0 %v816
        %1016 = vmatpush1.msra.mxu0 %v815
        %1017 = vmatprep.subr.mxu0 %v824
        %1018 = vmatpush1.msra.mxu0 %v823
        %1019 = vmatprep.subr.mxu0 %v832
        %1020 = vmatpush1.msra.mxu0 %v831
        %1021 = vmatprep.subr.mxu0 %v840
        %1022 = vmatpush1.msra.mxu0 %v839
        %1023 = vmatprep.subr.mxu0 %v848
        %1024 = vmatpush1.msra.mxu0 %v847
        %1025 = vmatprep.subr.mxu0 0.0
        %1026 = vmatpush1.msra.mxu0 0.0
        %1027 = vmatprep.subr.mxu0 0.0
        %1028 = vmatpush1.msra.mxu0 0.0
        %1029 = vmatprep.subr.mxu0 0.0
        %1030 = vmatpush1.msra.mxu0 0.0
        %1031 = vmatprep.subr.mxu0 0.0
        %1032 = vmatpush1.msra.mxu0 0.0
        %1033 = vmatprep.subr.mxu0 0.0
        %1034 = vmatpush1.msra.mxu0 0.0
        %1035 = vmatprep.subr.mxu0 0.0
        %1036 = vmatpush1.msra.mxu0 0.0
        %1037 = vmatprep.subr.mxu0 0.0
        %1038 = vmatpush1.msra.mxu0 0.0
        %1039 = vmatprep.subr.mxu0 0.0
        %1040 = vmatpush1.msra.mxu0 0.0
        %1041 = vmatprep.subr.mxu0 0.0
        %1042 = vmatpush1.msra.mxu0 0.0
        %1043 = vmatprep.subr.mxu0 0.0
        %1044 = vmatpush1.msra.mxu0 0.0
        %1045 = vmatprep.subr.mxu0 0.0
        %1046 = vmatpush1.msra.mxu0 0.0
        %1047 = vmatprep.subr.mxu0 0.0
        %1048 = vmatpush1.msra.mxu0 0.0
        %1049 = vmatprep.subr.mxu0 0.0
        %1050 = vmatpush1.msra.mxu0 0.0
        %1051 = vmatprep.subr.mxu0 0.0
        %1052 = vmatpush1.msra.mxu0 0.0
        %1053 = vmatprep.subr.mxu0 0.0
        %1054 = vmatpush1.msra.mxu0 0.0
        %1055 = vmatprep.subr.mxu0 0.0
        %1056 = vmatpush1.msra.mxu0 0.0
        %1057 = vmatprep.mubr.f32.mxu0 0.0
        %1058 = vmatmul.mubr.f32.gmra.mrb[0].mxu0 %v720
        %v1059 = vpop.f32.mrb[0].mxu0
        %v1060 = vadd.f32 0.0, %v1059
        %v1061 = vpop.f32.mrb[0].mxu0
        %v1062 = vadd.f32 0.0, %v1061
        %1063 = vdwg.mxu0
        %1064 = vmatprep.subr.mxu0 %v730
        %1065 = vmatpush1.msra.mxu0 %v729
        %1066 = vmatprep.subr.mxu0 %v738
        %1067 = vmatpush1.msra.mxu0 %v737
        %1068 = vmatprep.subr.mxu0 %v746
        %1069 = vmatpush1.msra.mxu0 %v745
        %1070 = vmatprep.subr.mxu0 %v754
        %1071 = vmatpush1.msra.mxu0 %v753
        %1072 = vmatprep.subr.mxu0 %v762
        %1073 = vmatpush1.msra.mxu0 %v761
        %1074 = vmatprep.subr.mxu0 %v770
        %1075 = vmatpush1.msra.mxu0 %v769
        %1076 = vmatprep.subr.mxu0 %v778
        %1077 = vmatpush1.msra.mxu0 %v777
        %1078 = vmatprep.subr.mxu0 %v786
        %1079 = vmatpush1.msra.mxu0 %v785
        %1080 = vmatprep.subr.mxu0 %v794
        %1081 = vmatpush1.msra.mxu0 %v793
        %1082 = vmatprep.subr.mxu0 %v802
        %1083 = vmatpush1.msra.mxu0 %v801
        %1084 = vmatprep.subr.mxu0 %v810
        %1085 = vmatpush1.msra.mxu0 %v809
        %1086 = vmatprep.subr.mxu0 %v818
        %1087 = vmatpush1.msra.mxu0 %v817
        %1088 = vmatprep.subr.mxu0 %v826
        %1089 = vmatpush1.msra.mxu0 %v825
        %1090 = vmatprep.subr.mxu0 %v834
        %1091 = vmatpush1.msra.mxu0 %v833
        %1092 = vmatprep.subr.mxu0 %v842
        %1093 = vmatpush1.msra.mxu0 %v841
        %1094 = vmatprep.subr.mxu0 %v850
        %1095 = vmatpush1.msra.mxu0 %v849
        %1096 = vmatprep.subr.mxu0 0.0
        %1097 = vmatpush1.msra.mxu0 0.0
        %1098 = vmatprep.subr.mxu0 0.0
        %1099 = vmatpush1.msra.mxu0 0.0
        %1100 = vmatprep.subr.mxu0 0.0
        %1101 = vmatpush1.msra.mxu0 0.0
        %1102 = vmatprep.subr.mxu0 0.0
        %1103 = vmatpush1.msra.mxu0 0.0
        %1104 = vmatprep.subr.mxu0 0.0
        %1105 = vmatpush1.msra.mxu0 0.0
        %1106 = vmatprep.subr.mxu0 0.0
        %1107 = vmatpush1.msra.mxu0 0.0
        %1108 = vmatprep.subr.mxu0 0.0
        %1109 = vmatpush1.msra.mxu0 0.0
        %1110 = vmatprep.subr.mxu0 0.0
        %1111 = vmatpush1.msra.mxu0 0.0
        %1112 = vmatprep.subr.mxu0 0.0
        %1113 = vmatpush1.msra.mxu0 0.0
        %1114 = vmatprep.subr.mxu0 0.0
        %1115 = vmatpush1.msra.mxu0 0.0
        %1116 = vmatprep.subr.mxu0 0.0
        %1117 = vmatpush1.msra.mxu0 0.0
        %1118 = vmatprep.subr.mxu0 0.0
        %1119 = vmatpush1.msra.mxu0 0.0
        %1120 = vmatprep.subr.mxu0 0.0
        %1121 = vmatpush1.msra.mxu0 0.0
        %1122 = vmatprep.subr.mxu0 0.0
        %1123 = vmatpush1.msra.mxu0 0.0
        %1124 = vmatprep.subr.mxu0 0.0
        %1125 = vmatpush1.msra.mxu0 0.0
        %1126 = vmatprep.subr.mxu0 0.0
        %1127 = vmatpush1.msra.mxu0 0.0
        %1128 = vmatprep.mubr.f32.mxu0 0.0
        %1129 = vmatmul.mubr.f32.gmra.mrb[0].mxu0 %v720
        %v1130 = vpop.f32.mrb[0].mxu0
        %v1131 = vadd.f32 0.0, %v1130
        %v1132 = vpop.f32.mrb[0].mxu0
        %v1133 = vadd.f32 0.0, %v1132
        %1134 = vdwg.mxu0
        %v1135 = vld [vmem:[#allocation2] sm:$0xff]
        %v1137 = vlaneseq
        %v1138 = vshrl.u32 %v1137, 7
        %v1139 = vsub.s32 0, %v1138
        %v1140 = vrot.slane %v1135, %v1139
        %v1141 = vlaneseq
        %v1142 = vshrl.u32 %v1141, 7
        %v1143 = vsub.s32 1, %v1142
        %v1144 = vrot.slane %v1135, %v1143
        %v1145 = vlaneseq
        %v1146 = vshrl.u32 %v1145, 7
        %v1147 = vsub.s32 2, %v1146
        %v1148 = vrot.slane %v1135, %v1147
        %v1149 = vlaneseq
        %v1150 = vshrl.u32 %v1149, 7
        %v1151 = vsub.s32 3, %v1150
        %v1152 = vrot.slane %v1135, %v1151
        %v1153 = vlaneseq
        %v1154 = vshrl.u32 %v1153, 7
        %v1155 = vsub.s32 4, %v1154
        %v1156 = vrot.slane %v1135, %v1155
        %v1157 = vlaneseq
        %v1158 = vshrl.u32 %v1157, 7
        %v1159 = vsub.s32 5, %v1158
        %v1160 = vrot.slane %v1135, %v1159
        %v1161 = vlaneseq
        %v1162 = vshrl.u32 %v1161, 7
        %v1163 = vsub.s32 6, %v1162
        %v1164 = vrot.slane %v1135, %v1163
        %v1165 = vlaneseq
        %v1166 = vshrl.u32 %v1165, 7
        %v1167 = vsub.s32 7, %v1166
        %v1168 = vrot.slane %v1135, %v1167
        %v1177 = vmul.f32 %v918, %v1140
        %v1178 = vmul.f32 %v920, %v1144
        %v1179 = vmul.f32 %v989, %v1148
        %v1180 = vmul.f32 %v991, %v1152
        %v1181 = vmul.f32 %v1060, %v1156
        %v1182 = vmul.f32 %v1062, %v1160
        %v1183 = vmul.f32 %v1131, %v1164
        %v1184 = vmul.f32 %v1133, %v1168
        %v1185 = vmax.f32 %v1177, -1.0
        %v1186 = vmax.f32 %v1178, -1.0
        %v1187 = vmax.f32 %v1179, -1.0
        %v1188 = vmax.f32 %v1180, -1.0
        %v1189 = vmax.f32 %v1181, -1.0
        %v1190 = vmax.f32 %v1182, -1.0
        %v1191 = vmax.f32 %v1183, -1.0
        %v1192 = vmax.f32 %v1184, -1.0
        %v1193 = vmin.f32 %v1185, 1.0
        %v1194 = vmin.f32 %v1186, 1.0
        %v1195 = vmin.f32 %v1187, 1.0
        %v1196 = vmin.f32 %v1188, 1.0
        %v1197 = vmin.f32 %v1189, 1.0
        %v1198 = vmin.f32 %v1190, 1.0
        %v1199 = vmin.f32 %v1191, 1.0
        %v1200 = vmin.f32 %v1192, 1.0
        %s1201 = smul.u32 %s31, 4
        %s1202 = sadd.s32 %s1201, %s30
        %s1203 = sld [smem:[#allocation4 + %s1202]]
        %p1204 = scmp.gt.s32.totalorder %s1203, 0
        // Predicated region
        $region45: #{tpu_custom_call.1} parent=31 // pred_check
          %p1205 = pneg %p1204
        $region46: #{tpu_custom_call.1} parent=31 // pred_check_branch
          %1207 = sbr.rel (%p1205) target = $region48
        $region47: #{tpu_custom_call.1} parent=31 // pred_region
          %v1208 = vmul.f32 %v1193, %v1193
          %v1209 = vmul.f32 %v1194, %v1194
          %v1210 = vmul.f32 %v1195, %v1195
          %v1211 = vmul.f32 %v1196, %v1196
          %v1212 = vmul.f32 %v1197, %v1197
          %v1213 = vmul.f32 %v1198, %v1198
          %v1214 = vmul.f32 %v1199, %v1199
          %v1215 = vmul.f32 %v1200, %v1200
          %v1216 = vsub.f32 1.0, %v1208
          %v1217 = vsub.f32 1.0, %v1209
          %v1218 = vsub.f32 1.0, %v1210
          %v1219 = vsub.f32 1.0, %v1211
          %v1220 = vsub.f32 1.0, %v1212
          %v1221 = vsub.f32 1.0, %v1213
          %v1222 = vsub.f32 1.0, %v1214
          %v1223 = vsub.f32 1.0, %v1215
          %v1224 = vmax.f32 %v1216, 0.0
          %v1225 = vmax.f32 %v1217, 0.0
          %v1226 = vmax.f32 %v1218, 0.0
          %v1227 = vmax.f32 %v1219, 0.0
          %v1228 = vmax.f32 %v1220, 0.0
          %v1229 = vmax.f32 %v1221, 0.0
          %v1230 = vmax.f32 %v1222, 0.0
          %v1231 = vmax.f32 %v1223, 0.0
          %v1232 = vrsqrt.pop %v1224
          %v1233 = vmul.f32 %v1224, %v1232
          %vm1234 = vcmp.eq.f32.partialorder %v1224, inf
          %v1235 = vsel %vm1234, %v1224, %v1233
          %vm1236 = vcmp.eq.f32.partialorder %v1224, 0.0
          %v1237 = vand.u32 %v1224, 2147483648
          %v1238 = vsel %vm1236, %v1237, %v1235
          %v1239 = vrsqrt.pop %v1225
          %v1240 = vmul.f32 %v1225, %v1239
          %vm1241 = vcmp.eq.f32.partialorder %v1225, inf
          %v1242 = vsel %vm1241, %v1225, %v1240
          %vm1243 = vcmp.eq.f32.partialorder %v1225, 0.0
          %v1244 = vand.u32 %v1225, 2147483648
          %v1245 = vsel %vm1243, %v1244, %v1242
          %v1246 = vrsqrt.pop %v1226
          %v1247 = vmul.f32 %v1226, %v1246
          %vm1248 = vcmp.eq.f32.partialorder %v1226, inf
          %v1249 = vsel %vm1248, %v1226, %v1247
          %vm1250 = vcmp.eq.f32.partialorder %v1226, 0.0
          %v1251 = vand.u32 %v1226, 2147483648
          %v1252 = vsel %vm1250, %v1251, %v1249
          %v1253 = vrsqrt.pop %v1227
          %v1254 = vmul.f32 %v1227, %v1253
          %vm1255 = vcmp.eq.f32.partialorder %v1227, inf
          %v1256 = vsel %vm1255, %v1227, %v1254
          %vm1257 = vcmp.eq.f32.partialorder %v1227, 0.0
          %v1258 = vand.u32 %v1227, 2147483648
          %v1259 = vsel %vm1257, %v1258, %v1256
          %v1260 = vrsqrt.pop %v1228
          %v1261 = vmul.f32 %v1228, %v1260
          %vm1262 = vcmp.eq.f32.partialorder %v1228, inf
          %v1263 = vsel %vm1262, %v1228, %v1261
          %vm1264 = vcmp.eq.f32.partialorder %v1228, 0.0
          %v1265 = vand.u32 %v1228, 2147483648
          %v1266 = vsel %vm1264, %v1265, %v1263
          %v1267 = vrsqrt.pop %v1229
          %v1268 = vmul.f32 %v1229, %v1267
          %vm1269 = vcmp.eq.f32.partialorder %v1229, inf
          %v1270 = vsel %vm1269, %v1229, %v1268
          %vm1271 = vcmp.eq.f32.partialorder %v1229, 0.0
          %v1272 = vand.u32 %v1229, 2147483648
          %v1273 = vsel %vm1271, %v1272, %v1270
          %v1274 = vrsqrt.pop %v1230
          %v1275 = vmul.f32 %v1230, %v1274
          %vm1276 = vcmp.eq.f32.partialorder %v1230, inf
          %v1277 = vsel %vm1276, %v1230, %v1275
          %vm1278 = vcmp.eq.f32.partialorder %v1230, 0.0
          %v1279 = vand.u32 %v1230, 2147483648
          %v1280 = vsel %vm1278, %v1279, %v1277
          %v1281 = vrsqrt.pop %v1231
          %v1282 = vmul.f32 %v1231, %v1281
          %vm1283 = vcmp.eq.f32.partialorder %v1231, inf
          %v1284 = vsel %vm1283, %v1231, %v1282
          %vm1285 = vcmp.eq.f32.partialorder %v1231, 0.0
          %v1286 = vand.u32 %v1231, 2147483648
          %v1287 = vsel %vm1285, %v1286, %v1284
          %v1288 = vmul.f32 %v1193, 0.87758255
          %v1289 = vmul.f32 %v1194, 0.87758255
          %v1290 = vmul.f32 %v1195, 0.87758255
          %v1291 = vmul.f32 %v1196, 0.87758255
          %v1292 = vmul.f32 %v1197, 0.87758255
          %v1293 = vmul.f32 %v1198, 0.87758255
          %v1294 = vmul.f32 %v1199, 0.87758255
          %v1295 = vmul.f32 %v1200, 0.87758255
          %v1296 = vmul.f32 %v1238, 0.47942555
          %v1297 = vmul.f32 %v1245, 0.47942555
          %v1298 = vmul.f32 %v1252, 0.47942555
          %v1299 = vmul.f32 %v1259, 0.47942555
          %v1300 = vmul.f32 %v1266, 0.47942555
          %v1301 = vmul.f32 %v1273, 0.47942555
          %v1302 = vmul.f32 %v1280, 0.47942555
          %v1303 = vmul.f32 %v1287, 0.47942555
          %v1304 = vsub.f32 %v1288, %v1296
          %v1305 = vsub.f32 %v1289, %v1297
          %v1306 = vsub.f32 %v1290, %v1298
          %v1307 = vsub.f32 %v1291, %v1299
          %v1308 = vsub.f32 %v1292, %v1300
          %v1309 = vsub.f32 %v1293, %v1301
          %v1310 = vsub.f32 %v1294, %v1302
          %v1311 = vsub.f32 %v1295, %v1303
          %v1312 = vsub.f32 %v1193, -0.87758255
          %v1313 = vsub.f32 %v1194, -0.87758255
          %v1314 = vsub.f32 %v1195, -0.87758255
          %v1315 = vsub.f32 %v1196, -0.87758255
          %v1316 = vsub.f32 %v1197, -0.87758255
          %v1317 = vsub.f32 %v1198, -0.87758255
          %v1318 = vsub.f32 %v1199, -0.87758255
          %v1319 = vsub.f32 %v1200, -0.87758255
          %vm1320 = vcmp.le.f32.partialorder %v1312, 0.0
          %vm1321 = vcmp.le.f32.partialorder %v1313, 0.0
          %vm1322 = vcmp.le.f32.partialorder %v1314, 0.0
          %vm1323 = vcmp.le.f32.partialorder %v1315, 0.0
          %vm1324 = vcmp.le.f32.partialorder %v1316, 0.0
          %vm1325 = vcmp.le.f32.partialorder %v1317, 0.0
          %vm1326 = vcmp.le.f32.partialorder %v1318, 0.0
          %vm1327 = vcmp.le.f32.partialorder %v1319, 0.0
          %v1328 = vsub.f32 %v1193, 0.23971277
          %v1329 = vsub.f32 %v1194, 0.23971277
          %v1330 = vsub.f32 %v1195, 0.23971277
          %v1331 = vsub.f32 %v1196, 0.23971277
          %v1332 = vsub.f32 %v1197, 0.23971277
          %v1333 = vsub.f32 %v1198, 0.23971277
          %v1334 = vsub.f32 %v1199, 0.23971277
          %v1335 = vsub.f32 %v1200, 0.23971277
          %v1336 = vsel %vm1320, %v1328, %v1304
          %v1337 = vsel %vm1321, %v1329, %v1305
          %v1338 = vsel %vm1322, %v1330, %v1306
          %v1339 = vsel %vm1323, %v1331, %v1307
          %v1340 = vsel %vm1324, %v1332, %v1308
          %v1341 = vsel %vm1325, %v1333, %v1309
          %v1342 = vsel %vm1326, %v1334, %v1310
          %v1343 = vsel %vm1327, %v1335, %v1311
          %s1344 = smul.u32 %s30, 1024
          %v1345 = vlaneseq
          %v1346 = vand.u32 %v1345, 127
          %v1347 = vadd.s32 %v1346, 128
          %v1348 = vadd.s32 %v1346, 256
          %v1349 = vadd.s32 %v1346, 384
          %v1350 = vadd.s32 %v1346, 512
          %v1351 = vadd.s32 %v1346, 640
          %v1352 = vadd.s32 %v1346, 768
          %v1353 = vadd.s32 %v1346, 896
          %v1354 = vstv %s1344
          %v1355 = vadd.s32 %v1354, %v1346
          %v1356 = vadd.s32 %v1354, %v1347
          %v1357 = vadd.s32 %v1354, %v1348
          %v1358 = vadd.s32 %v1354, %v1349
          %v1359 = vadd.s32 %v1354, %v1350
          %v1360 = vadd.s32 %v1354, %v1351
          %v1361 = vadd.s32 %v1354, %v1352
          %v1362 = vadd.s32 %v1354, %v1353
          %1363 = vset.pattern.permute.xlu0 0
          %1364 = vperm.xlu0 %1363, %v722
          %v1365 = vpop.permute.xlu0 %1364
          %vm1366 = vcmp.eq.s32.totalorder %v1355, %v1365
          %vm1367 = vcmp.eq.s32.totalorder %v1356, %v1365
          %vm1368 = vcmp.eq.s32.totalorder %v1357, %v1365
          %vm1369 = vcmp.eq.s32.totalorder %v1358, %v1365
          %vm1370 = vcmp.eq.s32.totalorder %v1359, %v1365
          %vm1371 = vcmp.eq.s32.totalorder %v1360, %v1365
          %vm1372 = vcmp.eq.s32.totalorder %v1361, %v1365
          %vm1373 = vcmp.eq.s32.totalorder %v1362, %v1365
          %v1374 = vsel %vm1366, %v1336, %v1193
          %v1375 = vsel %vm1367, %v1337, %v1194
          %v1376 = vsel %vm1368, %v1338, %v1195
          %v1377 = vsel %vm1369, %v1339, %v1196
          %v1378 = vsel %vm1370, %v1340, %v1197
          %v1379 = vsel %vm1371, %v1341, %v1198
          %v1380 = vsel %vm1372, %v1342, %v1199
          %v1381 = vsel %vm1373, %v1343, %v1200
          %v1382 = vmul.f32 %v1374, 64.0
          %v1383 = vmul.f32 %v1375, 64.0
          %v1384 = vmul.f32 %v1376, 64.0
          %v1385 = vmul.f32 %v1377, 64.0
          %v1386 = vmul.f32 %v1378, 64.0
          %v1387 = vmul.f32 %v1379, 64.0
          %v1388 = vmul.f32 %v1380, 64.0
          %v1389 = vmul.f32 %v1381, 64.0
          %1390 = vst [vmem:[%s220] sm:$0xff] %v1382
          %1391 = vst [vmem:[%s220 + $0x8] sm:$0xff] %v1383
          %1392 = vst [vmem:[%s220 + $0x10] sm:$0xff] %v1384
          %1393 = vst [vmem:[%s220 + $0x18] sm:$0xff] %v1385
          %1394 = vst [vmem:[%s220 + $0x20] sm:$0xff] %v1386
          %1395 = vst [vmem:[%s220 + $0x28] sm:$0xff] %v1387
          %1396 = vst [vmem:[%s220 + $0x30] sm:$0xff] %v1388
          %1397 = vst [vmem:[%s220 + $0x38] sm:$0xff] %v1389
        $region48: #{tpu_custom_call.1} parent=31 // pred_fallthru
          _
        %p1398 = scmp.le.s32.totalorder %s1203, 0
        // Predicated region
        $region49: #{tpu_custom_call.1} parent=31 // pred_check
          %p1399 = pneg %p1398
        $region50: #{tpu_custom_call.1} parent=31 // pred_check_branch
          %1401 = sbr.rel (%p1399) target = $region52
        $region51: #{tpu_custom_call.1} parent=31 // pred_region
          %v1402 = vmul.f32 %v1193, 64.0
          %v1403 = vmul.f32 %v1194, 64.0
          %v1404 = vmul.f32 %v1195, 64.0
          %v1405 = vmul.f32 %v1196, 64.0
          %v1406 = vmul.f32 %v1197, 64.0
          %v1407 = vmul.f32 %v1198, 64.0
          %v1408 = vmul.f32 %v1199, 64.0
          %v1409 = vmul.f32 %v1200, 64.0
          %1410 = vst [vmem:[%s220] sm:$0xff] %v1402
          %1411 = vst [vmem:[%s220 + $0x8] sm:$0xff] %v1403
          %1412 = vst [vmem:[%s220 + $0x10] sm:$0xff] %v1404
          %1413 = vst [vmem:[%s220 + $0x18] sm:$0xff] %v1405
          %1414 = vst [vmem:[%s220 + $0x20] sm:$0xff] %v1406
          %1415 = vst [vmem:[%s220 + $0x28] sm:$0xff] %v1407
          %1416 = vst [vmem:[%s220 + $0x30] sm:$0xff] %v1408
          %1417 = vst [vmem:[%s220 + $0x38] sm:$0xff] %v1409
        $region52: #{tpu_custom_call.1} parent=31 // pred_fallthru
          _
        %s1418 = sand.u32 %s116, 1
        %s1419 = scalar_lea.sflag [#allocation7], %s1418
        %s1420 = sand.u32 %s116, 1
        %s1421 = smul.addr %s1420, 64
        %s1422 = scalar_lea.vmem [#allocation10], %s1421
        // Predicated region
        $region53: #{tpu_custom_call.1} parent=31 // pred_check
          %p1423 = pneg %p126
        $region54: #{tpu_custom_call.1} parent=31 // pred_check_branch
          %1425 = sbr.rel (%p1423) target = $region56
        $region55: #{tpu_custom_call.1} parent=31 // pred_region
          %s1426 = smul.u32 8, %s30
          %s1428 = ssub.s32 1024, 1024
          %1429 = vsyncadd %s1419, %s1428
          %s1430 = smul.addr %s31, 32
          %s1431 = sadd.s32 %s1426, %s1430
          %s1432 = smul.addr %s1431, 128
          %s1433 = scalar_lea.hbm %s4, %s1432
          %s1435 = sshll.u32 %s1422, 4
          %s1436 = int_to_ptr.vmem [resolvable:$true] %s1435
          %1438 = dma.vmem_to_hbm [thread:$0]  %s1436, 1024, %s1433, %s1419
        $region56: #{tpu_custom_call.1} parent=31 // pred_fallthru
          _
      $region32: #{tpu_custom_call.1} parent=5 // pred_fallthru
        _
      %p1439 = scmp.le.s32.totalorder 2, %s21
      // Predicated region
      $region57: #{tpu_custom_call.1} parent=5 // pred_check
        %p1440 = pneg %p1439
      $region58: #{tpu_custom_call.1} parent=5 // pred_check_branch
        %1442 = sbr.rel (%p1440) target = $region60
      $region59: #{tpu_custom_call.1} parent=5 // pred_region
        %s1443 = ssub.s32 %s21, 2
        // Predicated region
        $region61: #{tpu_custom_call.1} parent=59 // pred_check
          %p1444 = pneg %p132
        $region62: #{tpu_custom_call.1} parent=59 // pred_check_branch
          %1446 = sbr.rel (%p1444) target = $region64
        $region63: #{tpu_custom_call.1} parent=59 // pred_region
          %s1447 = sand.u32 %s117, 1
          %s1448 = scalar_lea.sflag [#allocation7], %s1447
          %s1449 = sand.u32 %s117, 1
          %s1450 = smul.addr %s1449, 64
          %s1451 = scalar_lea.vmem [#allocation10], %s1450
          %1452 = dma.done %s1448, 1024
        $region64: #{tpu_custom_call.1} parent=59 // pred_fallthru
          _
      $region60: #{tpu_custom_call.1} parent=5 // pred_fallthru
        _
    $region6: #{tpu_custom_call.1} parent=1 // loop_footer
      %s25 = sadd.s32 1, %s21
    $region7: #{tpu_custom_call.1} parent=1 // loop_footer_branch
      %20 = sbr.rel target = $region3
    $region8: #{tpu_custom_call.1} parent=1 // loop_exit
      _
    %1453 = vsyncpa [#allocation6], 1
    %s1454 = scalar_lea.sflag [#allocation6], 1
    %1455 = vsyncpa %s1454, 1
    %1456 = vsyncpa [#allocation9], 1
    %s1457 = scalar_lea.sflag [#allocation9], 1
    %1458 = vsyncpa %s1457, 1
    %1459 = vsyncpa [#allocation7], 1
    %s1460 = scalar_lea.sflag [#allocation7], 1
    %1461 = vsyncpa %s1460, 1

</llo_original>
